<compile_context>
chip_gen: v7x
topology: tpu7x:2x2x1
jax: 0.10.0
libtpu: 0.0.40
codegen_flags: <defaults>
</compile_context>

<pallas_src>
import math
import functools

import jax
import jax.numpy as jnp
from jax.experimental import pallas as pl
from jax.experimental.pallas import tpu as pltpu

D_MODEL = 32
N_HEADS = 4


# ----------------------------- fused MHA kernel -----------------------------

def _mha_kernel(*refs, n_heads, d_k, self_attn):
    if self_attn:
        xq_ref, bias_ref, wqkv_ref, bqkv_ref, wo_ref, bo_ref, o_ref = refs
    else:
        (xq_ref, xk_ref, xv_ref, bias_ref,
         wqkv_ref, bqkv_ref, wo_ref, bo_ref, o_ref) = refs

    b_blk, s, d = xq_ref.shape          # (batch block, seq, d_model)
    rows = b_blk * s

    wqkv = wqkv_ref[...]                # (D, 3D) packed [wq | wk | wv]
    bqkv = bqkv_ref[...]                # (1, 3D)

    if self_attn:
        # Single fused projection matmul over the whole flattened batch block.
        x = xq_ref[...].reshape(rows, d).astype(jnp.float32)
        qkv = jnp.dot(x, wqkv, preferred_element_type=jnp.float32) + bqkv
        q, k, v = qkv[:, :d], qkv[:, d:2 * d], qkv[:, 2 * d:]
    else:
        xq = xq_ref[...].reshape(rows, d).astype(jnp.float32)
        xk = xk_ref[...].reshape(rows, d).astype(jnp.float32)
        xv = xv_ref[...].reshape(rows, d).astype(jnp.float32)
        q = jnp.dot(xq, wqkv[:, :d], preferred_element_type=jnp.float32) + bqkv[:, :d]
        k = jnp.dot(xk, wqkv[:, d:2 * d], preferred_element_type=jnp.float32) + bqkv[:, d:2 * d]
        v = jnp.dot(xv, wqkv[:, 2 * d:], preferred_element_type=jnp.float32) + bqkv[:, 2 * d:]

    # Fold heads into the leading batch axis: (rows, D) -> (h*b_blk, S, d_k).
    def head_stack(t2):
        t3 = t2.reshape(b_blk, s, d)
        return jnp.concatenate(
            [t3[:, :, h * d_k:(h + 1) * d_k] for h in range(n_heads)], axis=0)

    qg = head_stack(q)
    kg = head_stack(k)
    vg = head_stack(v)

    # One batched contraction per stage (no per-head k.T, no per-head select).
    scale = jnp.float32(1.0 / math.sqrt(d_k))
    scores = jnp.einsum("gqd,gkd->gqk", qg, kg,
                        preferred_element_type=jnp.float32) * scale

    # Additive mask bias (-1e9 on masked keys), identical for every head.
    # Matches masked_fill+softmax for every row with >=1 unmasked key.
    bias = bias_ref[...]                                      # (b_blk, 1|S, S)
    scores = scores + jnp.concatenate([bias] * n_heads, axis=0)

    scores = scores - jnp.max(scores, axis=-1, keepdims=True)
    p = jnp.exp(scores)
    p = p / jnp.sum(p, axis=-1, keepdims=True)                # exact divide

    ctx_g = jnp.einsum("gqk,gkd->gqd", p, vg,
                       preferred_element_type=jnp.float32)    # (h*b_blk, S, d_k)

    # Head merge == lane concat back to (rows, D), then the output projection.
    ctx = jnp.concatenate(
        [ctx_g[h * b_blk:(h + 1) * b_blk] for h in range(n_heads)], axis=-1)
    ctx = ctx.reshape(rows, d)
    out = jnp.dot(ctx, wo_ref[...], preferred_element_type=jnp.float32) + bo_ref[...]
    o_ref[...] = out.reshape(b_blk, s, d).astype(o_ref.dtype)
    # TODO(synk): the PyTorch module also stashes the attention probabilities
    # in `self.attn`; not materialized here (forward output only).


# --------------------------------- wrapper -----------------------------------

def _additive_mask_bias(mask, B, S):
    """masked_fill semantics: True/nonzero == masked out.
    Returns a compact additive f32 bias: (B, 1, S) for key-padding masks,
    (B, S, S) for fully general masks."""
    if mask is None:
        return jnp.zeros((B, 1, S), jnp.float32)
    m = jnp.asarray(mask)
    if m.ndim == 2 and m.shape == (B, S):            # per-key padding mask
        m = m[:, None, :]
    if m.ndim == 3 and m.shape[-2] == 1:
        m = jnp.broadcast_to(m, (B, 1, S))
    else:
        m = jnp.broadcast_to(m, (B, S, S))
    return jnp.where(m != 0, jnp.float32(-1e9), jnp.float32(0.0))


def _num_batch_blocks(B, S):
    # 2 "parallel" blocks keep both v7x TensorCores busy, but only once each
    # block still has >=128 rows; otherwise a single big block wins on every
    # generation (per-step pipeline overhead dominates tiny blocks).
    if B % 2 == 0 and (B // 2) * S >= 128:
        return 2
    return 1


def multi_headed_attention(params, query, key, value, mask=None):
    """Fused MHA forward.  mask: True/nonzero == masked out; None, (B, S)
    key-padding, or anything broadcastable to (B, S, S)."""
    B, S, D = query.shape
    assert D % N_HEADS == 0
    # TODO(synk): differing key/value sequence length is not supported here.
    assert key.shape == (B, S, D) and value.shape == (B, S, D)
    d_k = D // N_HEADS

    # Pack the projection weights once (2 weight/bias DMAs instead of 6).
    wqkv = jnp.concatenate([params["wq"], params["wk"], params["wv"]], axis=1)
    bqkv = jnp.concatenate([params["bq"], params["bk"], params["bv"]]).reshape(1, 3 * D)
    wo = params["wo"]
    bo = params["bo"].reshape(1, D)

    bias = _additive_mask_bias(mask, B, S)           # (B, 1, S) or (B, S, S)
    Sm = bias.shape[1]

    nblk = _num_batch_blocks(B, S)
    b_blk = B // nblk

    self_attn = (query is key) and (key is value)
    kernel = functools.partial(_mha_kernel, n_heads=N_HEADS, d_k=d_k,
                               self_attn=self_attn)

    act_spec = pl.BlockSpec((b_blk, S, D), lambda i: (i, 0, 0))
    full2 = lambda i: (0, 0)

    in_specs = [act_spec]
    args = [query]
    if not self_attn:
        in_specs += [act_spec, act_spec]
        args += [key, value]
    in_specs += [
        pl.BlockSpec((b_blk, Sm, S), lambda i: (i, 0, 0)),          # mask bias
        pl.BlockSpec((D, 3 * D), full2), pl.BlockSpec((1, 3 * D), full2),  # wqkv, bqkv
        pl.BlockSpec((D, D), full2), pl.BlockSpec((1, D), full2),          # wo, bo
    ]
    args += [bias, wqkv, bqkv, wo, bo]

    return pl.pallas_call(
        kernel,
        out_shape=jax.ShapeDtypeStruct((B, S, D), query.dtype),
        grid=(nblk,),
        in_specs=in_specs,
        out_specs=pl.BlockSpec((b_blk, S, D), lambda i: (i, 0, 0)),
        compiler_params=pltpu.CompilerParams(
            dimension_semantics=("parallel",)),
    )(*args)


# ------------------------- pure-JAX reference check --------------------------

def mha_reference(params, query, key, value, mask=None):
    B, S, D = query.shape
    h, d_k = N_HEADS, D // N_HEADS

    def proj(x, w, b):
        return (x @ w + b).reshape(B, S, h, d_k).transpose(0, 2, 1, 3)

    q = proj(query, params["wq"], params["bq"])
    k = proj(key, params["wk"], params["bk"])
    v = proj(value, params["wv"], params["bv"])
    scores = jnp.einsum("bhqd,bhkd->bhqk", q, k) / math.sqrt(d_k)
    if mask is not None:
        masked = _additive_mask_bias(mask, B, S) < 0          # (B, 1|S, S)
        scores = jnp.where(masked[:, None, :, :], jnp.float32(-1e9), scores)
    p = jax.nn.softmax(scores, axis=-1)
    ctx = jnp.einsum("bhqk,bhkd->bhqd", p, v).transpose(0, 2, 1, 3).reshape(B, S, D)
    return ctx @ params["wo"] + params["bo"]


# ------------------------------- param init ----------------------------------

def init_params(seed_key):
    D = D_MODEL

    def dense(k, fan_in, fan_out):
        k1, k2 = jax.random.split(k)
        lim = 1.0 / math.sqrt(fan_in)            # torch.nn.Linear default init
        w = jax.random.uniform(k1, (fan_in, fan_out), jnp.float32, -lim, lim)
        b = jax.random.uniform(k2, (fan_out,), jnp.float32, -lim, lim)
        return w, b

    # NOTE: PyTorch's clones() would start all 4 Linears with identical
    # weights (deepcopy of one instance); distinct weights are used here to
    # exercise the kernel (trained-model scenario) -- forward semantics are
    # unchanged.
    ks = jax.random.split(seed_key, 4)
    wq, bq = dense(ks[0], D, D)
    wk, bk = dense(ks[1], D, D)
    wv, bv = dense(ks[2], D, D)
    wo, bo = dense(ks[3], D, D)
    return {"wq": wq, "bq": bq, "wk": wk, "bk": bk,
            "wv": wv, "bv": bv, "wo": wo, "bo": bo}


# ---------------------------------- main --------------------------------------

if __name__ == "__main__":
    root = jax.random.PRNGKey(0)
    kx, kq, kk, kv, kp = jax.random.split(root, 5)

    B, S = 2, 8
    params = init_params(kp)

    # masked_fill semantics: True => masked out.  Key-padding mask: batch 0
    # attends to all 8 keys, batch 1 masks the last two key positions.
    lens = jnp.array([8, 6])
    key_pad_mask = jnp.arange(S)[None, :] >= lens[:, None]       # (B, S)

    # 1) Self-attention (the DDECC use case): single fused QKV matmul path.
    x = jax.random.normal(kx, (B, S, D_MODEL), jnp.float32)
    out = multi_headed_attention(params, x, x, x, key_pad_mask)
    out = jax.block_until_ready(out)
    assert out.shape == (B, S, D_MODEL)
    assert bool(jnp.all(jnp.isfinite(out)))
    ref = mha_reference(params, x, x, x, key_pad_mask)
    # Tolerance dominated by MXU default-precision f32 matmuls (softmax divide
    # is exact in this version).
    assert bool(jnp.allclose(out, ref, atol=3e-2, rtol=3e-2)), \
        f"self-attn max abs err {float(jnp.max(jnp.abs(out - ref)))}"

    # 2) General q/k/v path (distinct inputs, full (B, S, S) mask).
    query = jax.random.normal(kq, (B, S, D_MODEL), jnp.float32)
    key_in = jax.random.normal(kk, (B, S, D_MODEL), jnp.float32)
    value = jax.random.normal(kv, (B, S, D_MODEL), jnp.float32)
    full_mask = jnp.broadcast_to(key_pad_mask[:, None, :], (B, S, S))
    out2 = multi_headed_attention(params, query, key_in, value, full_mask)
    out2 = jax.block_until_ready(out2)
    ref2 = mha_reference(params, query, key_in, value, full_mask)
    assert bool(jnp.allclose(out2, ref2, atol=3e-2, rtol=3e-2)), \
        f"cross-attn max abs err {float(jnp.max(jnp.abs(out2 - ref2)))}"

    print("KERNEL_OK")
</pallas_src>

<mosaic_0001>
module attributes {stable_mosaic.version = 11 : i64} {
  func.func @_mha_kernel(%arg0: i32, %arg1: memref<2x8x32xf32, #tpu.memory_space<vmem>>, %arg2: memref<2x1x8xf32, #tpu.memory_space<vmem>>, %arg3: memref<32x96xf32, #tpu.memory_space<vmem>>, %arg4: memref<1x96xf32, #tpu.memory_space<vmem>>, %arg5: memref<32x32xf32, #tpu.memory_space<vmem>>, %arg6: memref<1x32xf32, #tpu.memory_space<vmem>>, %arg7: memref<2x8x32xf32, #tpu.memory_space<vmem>>) attributes {dimension_semantics = [#tpu.dimension_semantics<parallel>], iteration_bounds = array<i64: 1>, scalar_prefetch = 0 : i64, scratch_operands = 0 : i64, tpu.core_type = #tpu.core_type<tc>, window_params = [{transform_indices = @transform_0, window_bounds = array<i64: 2, 8, 32>}, {transform_indices = @transform_1, window_bounds = array<i64: 2, 1, 8>}, {pipeline_mode = #tpu.pipeline_mode<synchronous>, transform_indices = @transform_2, window_bounds = array<i64: 32, 96>}, {pipeline_mode = #tpu.pipeline_mode<synchronous>, transform_indices = @transform_3, window_bounds = array<i64: 1, 96>}, {pipeline_mode = #tpu.pipeline_mode<synchronous>, transform_indices = @transform_4, window_bounds = array<i64: 32, 32>}, {pipeline_mode = #tpu.pipeline_mode<synchronous>, transform_indices = @transform_5, window_bounds = array<i64: 1, 32>}, {transform_indices = @transform_6, window_bounds = array<i64: 2, 8, 32>}]} {
    %c0 = arith.constant 0 : index
    %c0_0 = arith.constant 0 : index
    %0 = vector.load %arg3[%c0, %c0_0] : memref<32x96xf32, #tpu.memory_space<vmem>>, vector<32x96xf32>
    %c0_1 = arith.constant 0 : index
    %c0_2 = arith.constant 0 : index
    %1 = vector.load %arg4[%c0_1, %c0_2] : memref<1x96xf32, #tpu.memory_space<vmem>>, vector<1x96xf32>
    %c0_3 = arith.constant 0 : index
    %c0_4 = arith.constant 0 : index
    %c0_5 = arith.constant 0 : index
    %2 = vector.load %arg1[%c0_3, %c0_4, %c0_5] : memref<2x8x32xf32, #tpu.memory_space<vmem>>, vector<2x8x32xf32>
    %3 = vector.shape_cast %2 : vector<2x8x32xf32> to vector<16x32xf32>
    %cst = arith.constant dense<0.000000e+00> : vector<16x96xf32>
    %4 = tpu.matmul %3, %0, %cst {dimension_numbers = #tpu.dot_dimension_numbers<[1], [0], [0], [1], [0, 0, 1, 1], [], []>} : vector<16x32xf32>, vector<32x96xf32>, vector<16x96xf32> -> vector<16x96xf32>
    %5 = vector.broadcast %1 : vector<1x96xf32> to vector<16x96xf32>
    %6 = arith.addf %4, %5 : vector<16x96xf32>
    %7 = vector.extract_strided_slice %6 {offsets = [0, 0], sizes = [16, 32], strides = [1, 1]} : vector<16x96xf32> to vector<16x32xf32>
    %8 = vector.extract_strided_slice %6 {offsets = [0, 32], sizes = [16, 32], strides = [1, 1]} : vector<16x96xf32> to vector<16x32xf32>
    %9 = vector.extract_strided_slice %6 {offsets = [0, 64], sizes = [16, 32], strides = [1, 1]} : vector<16x96xf32> to vector<16x32xf32>
    %10 = vector.shape_cast %7 : vector<16x32xf32> to vector<2x8x32xf32>
    %11 = vector.extract_strided_slice %10 {offsets = [0, 0, 0], sizes = [2, 8, 8], strides = [1, 1, 1]} : vector<2x8x32xf32> to vector<2x8x8xf32>
    %12 = vector.extract_strided_slice %10 {offsets = [0, 0, 8], sizes = [2, 8, 8], strides = [1, 1, 1]} : vector<2x8x32xf32> to vector<2x8x8xf32>
    %13 = vector.extract_strided_slice %10 {offsets = [0, 0, 16], sizes = [2, 8, 8], strides = [1, 1, 1]} : vector<2x8x32xf32> to vector<2x8x8xf32>
    %14 = vector.extract_strided_slice %10 {offsets = [0, 0, 24], sizes = [2, 8, 8], strides = [1, 1, 1]} : vector<2x8x32xf32> to vector<2x8x8xf32>
    %15 = tpu.concatenate %11, %12, %13, %14 in 0 : vector<2x8x8xf32>, vector<2x8x8xf32>, vector<2x8x8xf32>, vector<2x8x8xf32> -> vector<8x8x8xf32>
    %16 = vector.shape_cast %8 : vector<16x32xf32> to vector<2x8x32xf32>
    %17 = vector.extract_strided_slice %16 {offsets = [0, 0, 0], sizes = [2, 8, 8], strides = [1, 1, 1]} : vector<2x8x32xf32> to vector<2x8x8xf32>
    %18 = vector.extract_strided_slice %16 {offsets = [0, 0, 8], sizes = [2, 8, 8], strides = [1, 1, 1]} : vector<2x8x32xf32> to vector<2x8x8xf32>
    %19 = vector.extract_strided_slice %16 {offsets = [0, 0, 16], sizes = [2, 8, 8], strides = [1, 1, 1]} : vector<2x8x32xf32> to vector<2x8x8xf32>
    %20 = vector.extract_strided_slice %16 {offsets = [0, 0, 24], sizes = [2, 8, 8], strides = [1, 1, 1]} : vector<2x8x32xf32> to vector<2x8x8xf32>
    %21 = tpu.concatenate %17, %18, %19, %20 in 0 : vector<2x8x8xf32>, vector<2x8x8xf32>, vector<2x8x8xf32>, vector<2x8x8xf32> -> vector<8x8x8xf32>
    %22 = vector.shape_cast %9 : vector<16x32xf32> to vector<2x8x32xf32>
    %23 = vector.extract_strided_slice %22 {offsets = [0, 0, 0], sizes = [2, 8, 8], strides = [1, 1, 1]} : vector<2x8x32xf32> to vector<2x8x8xf32>
    %24 = vector.extract_strided_slice %22 {offsets = [0, 0, 8], sizes = [2, 8, 8], strides = [1, 1, 1]} : vector<2x8x32xf32> to vector<2x8x8xf32>
    %25 = vector.extract_strided_slice %22 {offsets = [0, 0, 16], sizes = [2, 8, 8], strides = [1, 1, 1]} : vector<2x8x32xf32> to vector<2x8x8xf32>
    %26 = vector.extract_strided_slice %22 {offsets = [0, 0, 24], sizes = [2, 8, 8], strides = [1, 1, 1]} : vector<2x8x32xf32> to vector<2x8x8xf32>
    %27 = tpu.concatenate %23, %24, %25, %26 in 0 : vector<2x8x8xf32>, vector<2x8x8xf32>, vector<2x8x8xf32>, vector<2x8x8xf32> -> vector<8x8x8xf32>
    "tpu.trace_start"() <{level = 10 : i32, message = "gqd,gkd->gqk"}> : () -> ()
    %cst_6 = arith.constant dense<0.000000e+00> : vector<8x8x8xf32>
    %28 = tpu.matmul %15, %21, %cst_6 {dimension_numbers = #tpu.dot_dimension_numbers<[2], [2], [1], [1], [0, 0, 0, 1, 1, 1], [0], [0]>} : vector<8x8x8xf32>, vector<8x8x8xf32>, vector<8x8x8xf32> -> vector<8x8x8xf32>
    "tpu.trace_stop"() : () -> ()
    %cst_7 = arith.constant 0.353553385 : f32
    %29 = vector.broadcast %cst_7 : f32 to vector<8x8x8xf32>
    %30 = arith.mulf %28, %29 : vector<8x8x8xf32>
    %c0_8 = arith.constant 0 : index
    %c0_9 = arith.constant 0 : index
    %c0_10 = arith.constant 0 : index
    %31 = vector.load %arg2[%c0_8, %c0_9, %c0_10] : memref<2x1x8xf32, #tpu.memory_space<vmem>>, vector<2x1x8xf32>
    %32 = tpu.concatenate %31, %31, %31, %31 in 0 : vector<2x1x8xf32>, vector<2x1x8xf32>, vector<2x1x8xf32>, vector<2x1x8xf32> -> vector<8x1x8xf32>
    %33 = vector.broadcast %32 : vector<8x1x8xf32> to vector<8x8x8xf32>
    %34 = arith.addf %30, %33 : vector<8x8x8xf32>
    %cst_11 = arith.constant dense<0xFF800000> : vector<8x8xf32>
    %35 = vector.multi_reduction <maximumf>, %34, %cst_11 [2] : vector<8x8x8xf32> to vector<8x8xf32>
    %36 = vector.shape_cast %35 : vector<8x8xf32> to vector<8x8x1xf32>
    %37 = vector.broadcast %36 : vector<8x8x1xf32> to vector<8x8x8xf32>
    %38 = arith.subf %34, %37 : vector<8x8x8xf32>
    %39 = math.exp %38 : vector<8x8x8xf32>
    %cst_12 = arith.constant dense<0.000000e+00> : vector<8x8xf32>
    %40 = vector.multi_reduction <add>, %39, %cst_12 [2] : vector<8x8x8xf32> to vector<8x8xf32>
    %41 = vector.shape_cast %40 : vector<8x8xf32> to vector<8x8x1xf32>
    %42 = vector.broadcast %41 : vector<8x8x1xf32> to vector<8x8x8xf32>
    %43 = arith.divf %39, %42 : vector<8x8x8xf32>
    "tpu.trace_start"() <{level = 10 : i32, message = "gqk,gkd->gqd"}> : () -> ()
    %cst_13 = arith.constant dense<0.000000e+00> : vector<8x8x8xf32>
    %44 = tpu.matmul %43, %27, %cst_13 {dimension_numbers = #tpu.dot_dimension_numbers<[2], [1], [1], [2], [0, 0, 0, 1, 1, 2], [0], [0]>} : vector<8x8x8xf32>, vector<8x8x8xf32>, vector<8x8x8xf32> -> vector<8x8x8xf32>
    "tpu.trace_stop"() : () -> ()
    %45 = vector.extract_strided_slice %44 {offsets = [0, 0, 0], sizes = [2, 8, 8], strides = [1, 1, 1]} : vector<8x8x8xf32> to vector<2x8x8xf32>
    %46 = vector.extract_strided_slice %44 {offsets = [2, 0, 0], sizes = [2, 8, 8], strides = [1, 1, 1]} : vector<8x8x8xf32> to vector<2x8x8xf32>
    %47 = vector.extract_strided_slice %44 {offsets = [4, 0, 0], sizes = [2, 8, 8], strides = [1, 1, 1]} : vector<8x8x8xf32> to vector<2x8x8xf32>
    %48 = vector.extract_strided_slice %44 {offsets = [6, 0, 0], sizes = [2, 8, 8], strides = [1, 1, 1]} : vector<8x8x8xf32> to vector<2x8x8xf32>
    %49 = tpu.concatenate %45, %46, %47, %48 in 2 : vector<2x8x8xf32>, vector<2x8x8xf32>, vector<2x8x8xf32>, vector<2x8x8xf32> -> vector<2x8x32xf32>
    %50 = vector.shape_cast %49 : vector<2x8x32xf32> to vector<16x32xf32>
    %c0_14 = arith.constant 0 : index
    %c0_15 = arith.constant 0 : index
    %51 = vector.load %arg5[%c0_14, %c0_15] : memref<32x32xf32, #tpu.memory_space<vmem>>, vector<32x32xf32>
    %cst_16 = arith.constant dense<0.000000e+00> : vector<16x32xf32>
    %52 = tpu.matmul %50, %51, %cst_16 {dimension_numbers = #tpu.dot_dimension_numbers<[1], [0], [0], [1], [0, 0, 1, 1], [], []>} : vector<16x32xf32>, vector<32x32xf32>, vector<16x32xf32> -> vector<16x32xf32>
    %c0_17 = arith.constant 0 : index
    %c0_18 = arith.constant 0 : index
    %53 = vector.load %arg6[%c0_17, %c0_18] : memref<1x32xf32, #tpu.memory_space<vmem>>, vector<1x32xf32>
    %54 = vector.broadcast %53 : vector<1x32xf32> to vector<16x32xf32>
    %55 = arith.addf %52, %54 : vector<16x32xf32>
    %56 = vector.shape_cast %55 : vector<16x32xf32> to vector<2x8x32xf32>
    %c0_19 = arith.constant 0 : index
    %c0_20 = arith.constant 0 : index
    %c0_21 = arith.constant 0 : index
    %57 = vector.load %arg7[%c0_19, %c0_20, %c0_21] : memref<2x8x32xf32, #tpu.memory_space<vmem>>, vector<2x8x32xf32>
    tpu.vector_store %arg7[%c0_19, %c0_20, %c0_21], %56 {strides = array<i32>} : memref<2x8x32xf32, #tpu.memory_space<vmem>>, vector<2x8x32xf32>,
    return
  }
  func.func @transform_0(%arg0: i32) -> (i32, i32, i32) {
    %c0_i32 = arith.constant 0 : i32
    %c0_i32_0 = arith.constant 0 : i32
    %c0_i32_1 = arith.constant 0 : i32
    return %arg0, %c0_i32, %c0_i32_0 : i32, i32, i32
  }
  func.func @transform_1(%arg0: i32) -> (i32, i32, i32) {
    %c0_i32 = arith.constant 0 : i32
    %c0_i32_0 = arith.constant 0 : i32
    %c0_i32_1 = arith.constant 0 : i32
    return %arg0, %c0_i32, %c0_i32_0 : i32, i32, i32
  }
  func.func @transform_2(%arg0: i32) -> (i32, i32) {
    %c0_i32 = arith.constant 0 : i32
    %c0_i32_0 = arith.constant 0 : i32
    %c0_i32_1 = arith.constant 0 : i32
    return %c0_i32, %c0_i32_0 : i32, i32
  }
  func.func @transform_3(%arg0: i32) -> (i32, i32) {
    %c0_i32 = arith.constant 0 : i32
    %c0_i32_0 = arith.constant 0 : i32
    %c0_i32_1 = arith.constant 0 : i32
    return %c0_i32, %c0_i32_0 : i32, i32
  }
  func.func @transform_4(%arg0: i32) -> (i32, i32) {
    %c0_i32 = arith.constant 0 : i32
    %c0_i32_0 = arith.constant 0 : i32
    %c0_i32_1 = arith.constant 0 : i32
    return %c0_i32, %c0_i32_0 : i32, i32
  }
  func.func @transform_5(%arg0: i32) -> (i32, i32) {
    %c0_i32 = arith.constant 0 : i32
    %c0_i32_0 = arith.constant 0 : i32
    %c0_i32_1 = arith.constant 0 : i32
    return %c0_i32, %c0_i32_0 : i32, i32
  }
  func.func @transform_6(%arg0: i32) -> (i32, i32, i32) {
    %c0_i32 = arith.constant 0 : i32
    %c0_i32_0 = arith.constant 0 : i32
    %c0_i32_1 = arith.constant 0 : i32
    return %arg0, %c0_i32, %c0_i32_0 : i32, i32, i32
  }
}

</mosaic_0001>

<llo_original>
// kernel: tpu_custom_call.1
$region0: #{tpu_custom_call.1}
  #allocation0 [shape = 'u32[]', space=smem, size = 0x4, offset = 0x4, fixed_abs, tag = 'smem constant byte address 0x4 - core index']
  #allocation1 [shape = 'u32[144,128]{1,0:T(1,128)}', space=vmem, size = 0x12000, scoped, tag = 'internal scratch']
  %s0 = inlined_call_operand.hbm [shape: f32[2,8,32], index: 0, kind: input, shape index: {}]
  %s1 = inlined_call_operand.vmem [shape: f32[2,1,8], index: 1, kind: input, shape index: {}]
  %s2 = inlined_call_operand.hbm [shape: f32[32,96], index: 2, kind: input, shape index: {}]
  %s3 = inlined_call_operand.vmem [shape: f32[1,96], index: 3, kind: input, shape index: {}]
  %s4 = inlined_call_operand.hbm [shape: f32[32,32], index: 4, kind: input, shape index: {}]
  %s5 = inlined_call_operand.vmem [shape: f32[1,32], index: 5, kind: input, shape index: {}]
  %s6 = inlined_call_operand.hbm [shape: f32[2,8,32], index: 6, kind: output, shape index: {}]
  %s7 = sld [smem:[#allocation0]]
  $region46: #{tpu_custom_call.1} parent=0
    _
  %s9 = ssub.s32 1, %s7
  %s10 = scalar_select 0, %s9, %s7
  $region1: #{tpu_custom_call.1} parent=0
    #allocation2 [shape = 'u8[8192]{0}', space=vmem, size = 0x2000, scoped, tag = 'input window, operand 0, single buffered']
    #allocation3 [shape = 's32[1]{0}', space=sflag, size = 0x4, scoped, tag = 'scoped memory for tpu_custom_call.1']
    #allocation4 [shape = 's32[1]{0}', space=sflag, size = 0x4, scoped, tag = 'scoped memory for tpu_custom_call.1']
    #allocation5 [shape = 'u8[16384]{0}', space=vmem, size = 0x4000, scoped, tag = 'input window, operand 2, single buffered']
    #allocation6 [shape = 's32[1]{0}', space=sflag, size = 0x4, scoped, tag = 'scoped memory for tpu_custom_call.1']
    #allocation7 [shape = 'u8[16384]{0}', space=vmem, size = 0x4000, scoped, tag = 'input window, operand 4, single buffered']
    #allocation8 [shape = 'u8[8192]{0}', space=vmem, size = 0x2000, scoped, tag = 'output window, operand 0, single buffered']
    %11 = vsyncpa [#allocation3], 0
    %12 = vsyncpa [#allocation6], 0
    %13 = vsyncpa [#allocation4], 0
    // Predicated region
    $region2: #{tpu_custom_call.1} parent=1 // pred_check
      _
    $region3: #{tpu_custom_call.1} parent=1 // pred_check_branch
      %15 = sbr.rel (0) target = $region5
    $region4: #{tpu_custom_call.1} parent=1 // pred_region
      %s17 = ssub.s32 256, 256
      %18 = vsyncadd [#allocation3], %s17
      %s19 = sshll.u32 [#allocation2], 4
      %s20 = int_to_ptr.vmem [resolvable:$true] %s19
      %25 = dma.hbm_to_vmem [thread:$0]  %s0, 256, %s20, [#allocation3], 128, 128, 8
    $region5: #{tpu_custom_call.1} parent=1 // pred_fallthru
      _
    // Predicated region
    $region6: #{tpu_custom_call.1} parent=1 // pred_check
      _
    $region7: #{tpu_custom_call.1} parent=1 // pred_check_branch
      %27 = sbr.rel (0) target = $region9
    $region8: #{tpu_custom_call.1} parent=1 // pred_region
      _
    $region9: #{tpu_custom_call.1} parent=1 // pred_fallthru
      _
    // Predicated region
    $region10: #{tpu_custom_call.1} parent=1 // pred_check
      _
    $region11: #{tpu_custom_call.1} parent=1 // pred_check_branch
      %29 = sbr.rel (0) target = $region13
    $region12: #{tpu_custom_call.1} parent=1 // pred_region
      %s31 = ssub.s32 512, 512
      %32 = vsyncadd [#allocation6], %s31
      %s33 = sshll.u32 [#allocation5], 4
      %s34 = int_to_ptr.vmem [resolvable:$true] %s33
      %39 = dma.hbm_to_vmem [thread:$0]  %s2, 512, %s34, [#allocation6], 128, 128, 8
    $region13: #{tpu_custom_call.1} parent=1 // pred_fallthru
      _
    // Predicated region
    $region14: #{tpu_custom_call.1} parent=1 // pred_check
      _
    $region15: #{tpu_custom_call.1} parent=1 // pred_check_branch
      %41 = sbr.rel (0) target = $region17
    $region16: #{tpu_custom_call.1} parent=1 // pred_region
      _
    $region17: #{tpu_custom_call.1} parent=1 // pred_fallthru
      _
    // Predicated region
    $region18: #{tpu_custom_call.1} parent=1 // pred_check
      _
    $region19: #{tpu_custom_call.1} parent=1 // pred_check_branch
      %43 = sbr.rel (0) target = $region21
    $region20: #{tpu_custom_call.1} parent=1 // pred_region
      %s45 = ssub.s32 512, 512
      %46 = vsyncadd [#allocation6], %s45
      %s47 = sshll.u32 [#allocation7], 4
      %s48 = int_to_ptr.vmem [resolvable:$true] %s47
      %53 = dma.hbm_to_vmem [thread:$0]  %s4, 512, %s48, [#allocation6], 128, 128, 8
    $region21: #{tpu_custom_call.1} parent=1 // pred_fallthru
      _
    // Predicated region
    $region22: #{tpu_custom_call.1} parent=1 // pred_check
      _
    $region23: #{tpu_custom_call.1} parent=1 // pred_check_branch
      %55 = sbr.rel (0) target = $region25
    $region24: #{tpu_custom_call.1} parent=1 // pred_region
      _
    $region25: #{tpu_custom_call.1} parent=1 // pred_fallthru
      _
    // Predicated region
    $region26: #{tpu_custom_call.1} parent=1 // pred_check
      _
    $region27: #{tpu_custom_call.1} parent=1 // pred_check_branch
      %57 = sbr.rel (0) target = $region29
    $region28: #{tpu_custom_call.1} parent=1 // pred_region
      %58 = dma.done [#allocation3], 256
    $region29: #{tpu_custom_call.1} parent=1 // pred_fallthru
      _
    // Predicated region
    $region30: #{tpu_custom_call.1} parent=1 // pred_check
      _
    $region31: #{tpu_custom_call.1} parent=1 // pred_check_branch
      %60 = sbr.rel (0) target = $region33
    $region32: #{tpu_custom_call.1} parent=1 // pred_region
      %61 = dma.done [#allocation6], 512
    $region33: #{tpu_custom_call.1} parent=1 // pred_fallthru
      _
    // Predicated region
    $region34: #{tpu_custom_call.1} parent=1 // pred_check
      _
    $region35: #{tpu_custom_call.1} parent=1 // pred_check_branch
      %63 = sbr.rel (0) target = $region37
    $region36: #{tpu_custom_call.1} parent=1 // pred_region
      %64 = dma.done [#allocation6], 512
    $region37: #{tpu_custom_call.1} parent=1 // pred_fallthru
      _
    %v65 = vld [vmem:[#allocation5] sm:$0xff]
    %v66 = vld [vmem:[#allocation5 + $0x8] sm:$0xff]
    %v67 = vld [vmem:[#allocation5 + $0x10] sm:$0xff]
    %v68 = vld [vmem:[#allocation5 + $0x18] sm:$0xff]
    %v69 = vld [vmem:[%s3] sm:$0x1]
    %v70 = vld [vmem:[#allocation2] sm:$0xff]
    %v71 = vld [vmem:[#allocation2 + $0x8] sm:$0xff]
    %v73 = vlaneseq
    %v74 = vshrl.u32 %v73, 7
    %v75 = vsub.s32 0, %v74
    %v76 = vrot.slane %v69, %v75
    %vm78 = vcmask 261120
    %v80 = vsel %vm78, %v70, 0
    %v83 = vsel %vm78, %v71, 0
    %85 = vmatprep.subr.mxu0 0.0
    %86 = vmatpush1.msra.mxu0 %v65
    %87 = vmatprep.subr.mxu0 0.0
    %88 = vmatpush1.msra.mxu0 %v66
    %89 = vmatprep.subr.mxu0 0.0
    %90 = vmatpush1.msra.mxu0 %v67
    %91 = vmatprep.subr.mxu0 0.0
    %92 = vmatpush1.msra.mxu0 %v68
    %93 = vmatprep.subr.mxu0 0.0
    %94 = vmatpush1.msra.mxu0 0.0
    %95 = vmatprep.subr.mxu0 0.0
    %96 = vmatpush1.msra.mxu0 0.0
    %97 = vmatprep.subr.mxu0 0.0
    %98 = vmatpush1.msra.mxu0 0.0
    %99 = vmatprep.subr.mxu0 0.0
    %100 = vmatpush1.msra.mxu0 0.0
    %101 = vmatprep.subr.mxu0 0.0
    %102 = vmatpush1.msra.mxu0 0.0
    %103 = vmatprep.subr.mxu0 0.0
    %104 = vmatpush1.msra.mxu0 0.0
    %105 = vmatprep.subr.mxu0 0.0
    %106 = vmatpush1.msra.mxu0 0.0
    %107 = vmatprep.subr.mxu0 0.0
    %108 = vmatpush1.msra.mxu0 0.0
    %109 = vmatprep.subr.mxu0 0.0
    %110 = vmatpush1.msra.mxu0 0.0
    %111 = vmatprep.subr.mxu0 0.0
    %112 = vmatpush1.msra.mxu0 0.0
    %113 = vmatprep.subr.mxu0 0.0
    %114 = vmatpush1.msra.mxu0 0.0
    %115 = vmatprep.subr.mxu0 0.0
    %116 = vmatpush1.msra.mxu0 0.0
    %117 = vmatprep.subr.mxu0 0.0
    %118 = vmatpush1.msra.mxu0 0.0
    %119 = vmatprep.subr.mxu0 0.0
    %120 = vmatpush1.msra.mxu0 0.0
    %121 = vmatprep.subr.mxu0 0.0
    %122 = vmatpush1.msra.mxu0 0.0
    %123 = vmatprep.subr.mxu0 0.0
    %124 = vmatpush1.msra.mxu0 0.0
    %125 = vmatprep.subr.mxu0 0.0
    %126 = vmatpush1.msra.mxu0 0.0
    %127 = vmatprep.subr.mxu0 0.0
    %128 = vmatpush1.msra.mxu0 0.0
    %129 = vmatprep.subr.mxu0 0.0
    %130 = vmatpush1.msra.mxu0 0.0
    %131 = vmatprep.subr.mxu0 0.0
    %132 = vmatpush1.msra.mxu0 0.0
    %133 = vmatprep.subr.mxu0 0.0
    %134 = vmatpush1.msra.mxu0 0.0
    %135 = vmatprep.subr.mxu0 0.0
    %136 = vmatpush1.msra.mxu0 0.0
    %137 = vmatprep.subr.mxu0 0.0
    %138 = vmatpush1.msra.mxu0 0.0
    %139 = vmatprep.subr.mxu0 0.0
    %140 = vmatpush1.msra.mxu0 0.0
    %141 = vmatprep.subr.mxu0 0.0
    %142 = vmatpush1.msra.mxu0 0.0
    %143 = vmatprep.subr.mxu0 0.0
    %144 = vmatpush1.msra.mxu0 0.0
    %145 = vmatprep.subr.mxu0 0.0
    %146 = vmatpush1.msra.mxu0 0.0
    %147 = vmatprep.subr.mxu0 0.0
    %148 = vmatpush1.msra.mxu0 0.0
    %149 = vmatprep.mubr.f32.mxu0 0.0
    %150 = vmatmul.mubr.f32.gmra.mrb[0].mxu0 %v80
    %v151 = vpop.f32.mrb[0].mxu0
    %v152 = vadd.f32 %v76, %v151
    %v153 = vpop.f32.mrb[0].mxu0
    %154 = vmatprep.mubr.f32.mxu0 0.0
    %155 = vmatmul.mubr.f32.gmra.mrb[0].mxu0 %v83
    %v156 = vpop.f32.mrb[0].mxu0
    %v157 = vadd.f32 %v76, %v156
    %v158 = vpop.f32.mrb[0].mxu0
    %159 = vdwg.mxu0
    %162 = vrot.lane.b32.xlu0 %v152, 120
    %v163 = vpop.permute.xlu0 %162
    %164 = vrot.lane.b32.xlu0 %v157, 120
    %v165 = vpop.permute.xlu0 %164
    %166 = vrot.lane.b32.xlu0 %v152, 112
    %v167 = vpop.permute.xlu0 %166
    %168 = vrot.lane.b32.xlu0 %v157, 112
    %v169 = vpop.permute.xlu0 %168
    %170 = vrot.lane.b32.xlu0 %v152, 104
    %v171 = vpop.permute.xlu0 %170
    %172 = vrot.lane.b32.xlu0 %v157, 104
    %v173 = vpop.permute.xlu0 %172
    %174 = vrot.lane.b32.xlu0 %v152, 96
    %v175 = vpop.permute.xlu0 %174
    %vm176 = vcmask 64512
    %v177 = vsel %vm176, %v152, 0
    %v179 = vsel %vm176, %v175, 0
    %181 = vmatprep.subr.mxu0 0.0
    %182 = vmatpush1.xpose.msra.mxu0 %v179
    %183 = vmatprep.subr.mxu0 0.0
    %184 = vmatpush1.xpose.msra.mxu0 0.0
    %185 = vmatprep.subr.mxu0 0.0
    %186 = vmatpush1.xpose.msra.mxu0 0.0
    %187 = vmatprep.subr.mxu0 0.0
    %188 = vmatpush1.xpose.msra.mxu0 0.0
    %189 = vmatprep.subr.mxu0 0.0
    %190 = vmatpush1.xpose.msra.mxu0 0.0
    %191 = vmatprep.subr.mxu0 0.0
    %192 = vmatpush1.xpose.msra.mxu0 0.0
    %193 = vmatprep.subr.mxu0 0.0
    %194 = vmatpush1.xpose.msra.mxu0 0.0
    %195 = vmatprep.subr.mxu0 0.0
    %196 = vmatpush1.xpose.msra.mxu0 0.0
    %197 = vmatprep.subr.mxu0 0.0
    %198 = vmatpush1.xpose.msra.mxu0 0.0
    %199 = vmatprep.subr.mxu0 0.0
    %200 = vmatpush1.xpose.msra.mxu0 0.0
    %201 = vmatprep.subr.mxu0 0.0
    %202 = vmatpush1.xpose.msra.mxu0 0.0
    %203 = vmatprep.subr.mxu0 0.0
    %204 = vmatpush1.xpose.msra.mxu0 0.0
    %205 = vmatprep.subr.mxu0 0.0
    %206 = vmatpush1.xpose.msra.mxu0 0.0
    %207 = vmatprep.subr.mxu0 0.0
    %208 = vmatpush1.xpose.msra.mxu0 0.0
    %209 = vmatprep.subr.mxu0 0.0
    %210 = vmatpush1.xpose.msra.mxu0 0.0
    %211 = vmatprep.subr.mxu0 0.0
    %212 = vmatpush1.xpose.msra.mxu0 0.0
    %213 = vmatprep.subr.mxu0 0.0
    %214 = vmatpush1.xpose.msra.mxu0 0.0
    %215 = vmatprep.subr.mxu0 0.0
    %216 = vmatpush1.xpose.msra.mxu0 0.0
    %217 = vmatprep.subr.mxu0 0.0
    %218 = vmatpush1.xpose.msra.mxu0 0.0
    %219 = vmatprep.subr.mxu0 0.0
    %220 = vmatpush1.xpose.msra.mxu0 0.0
    %221 = vmatprep.subr.mxu0 0.0
    %222 = vmatpush1.xpose.msra.mxu0 0.0
    %223 = vmatprep.subr.mxu0 0.0
    %224 = vmatpush1.xpose.msra.mxu0 0.0
    %225 = vmatprep.subr.mxu0 0.0
    %226 = vmatpush1.xpose.msra.mxu0 0.0
    %227 = vmatprep.subr.mxu0 0.0
    %228 = vmatpush1.xpose.msra.mxu0 0.0
    %229 = vmatprep.subr.mxu0 0.0
    %230 = vmatpush1.xpose.msra.mxu0 0.0
    %231 = vmatprep.subr.mxu0 0.0
    %232 = vmatpush1.xpose.msra.mxu0 0.0
    %233 = vmatprep.subr.mxu0 0.0
    %234 = vmatpush1.xpose.msra.mxu0 0.0
    %235 = vmatprep.subr.mxu0 0.0
    %236 = vmatpush1.xpose.msra.mxu0 0.0
    %237 = vmatprep.subr.mxu0 0.0
    %238 = vmatpush1.xpose.msra.mxu0 0.0
    %239 = vmatprep.subr.mxu0 0.0
    %240 = vmatpush1.xpose.msra.mxu0 0.0
    %241 = vmatprep.subr.mxu0 0.0
    %242 = vmatpush1.xpose.msra.mxu0 0.0
    %243 = vmatprep.subr.mxu0 0.0
    %244 = vmatpush1.xpose.msra.mxu0 0.0
    %245 = vmatprep.mubr.f32.mxu0 0.0
    %246 = vmatmul.mubr.f32.gmra.mrb[0].mxu0 %v177
    %v247 = vpop.f32.mrb[0].mxu0
    %v248 = vadd.f32 0.0, %v247
    %v249 = vpop.f32.mrb[0].mxu0
    %250 = vdwg.mxu0
    %251 = vrot.lane.b32.xlu0 %v157, 96
    %v252 = vpop.permute.xlu0 %251
    %v253 = vsel %vm176, %v157, 0
    %v255 = vsel %vm176, %v252, 0
    %257 = vmatprep.subr.mxu0 0.0
    %258 = vmatpush1.xpose.msra.mxu0 %v255
    %259 = vmatprep.subr.mxu0 0.0
    %260 = vmatpush1.xpose.msra.mxu0 0.0
    %261 = vmatprep.subr.mxu0 0.0
    %262 = vmatpush1.xpose.msra.mxu0 0.0
    %263 = vmatprep.subr.mxu0 0.0
    %264 = vmatpush1.xpose.msra.mxu0 0.0
    %265 = vmatprep.subr.mxu0 0.0
    %266 = vmatpush1.xpose.msra.mxu0 0.0
    %267 = vmatprep.subr.mxu0 0.0
    %268 = vmatpush1.xpose.msra.mxu0 0.0
    %269 = vmatprep.subr.mxu0 0.0
    %270 = vmatpush1.xpose.msra.mxu0 0.0
    %271 = vmatprep.subr.mxu0 0.0
    %272 = vmatpush1.xpose.msra.mxu0 0.0
    %273 = vmatprep.subr.mxu0 0.0
    %274 = vmatpush1.xpose.msra.mxu0 0.0
    %275 = vmatprep.subr.mxu0 0.0
    %276 = vmatpush1.xpose.msra.mxu0 0.0
    %277 = vmatprep.subr.mxu0 0.0
    %278 = vmatpush1.xpose.msra.mxu0 0.0
    %279 = vmatprep.subr.mxu0 0.0
    %280 = vmatpush1.xpose.msra.mxu0 0.0
    %281 = vmatprep.subr.mxu0 0.0
    %282 = vmatpush1.xpose.msra.mxu0 0.0
    %283 = vmatprep.subr.mxu0 0.0
    %284 = vmatpush1.xpose.msra.mxu0 0.0
    %285 = vmatprep.subr.mxu0 0.0
    %286 = vmatpush1.xpose.msra.mxu0 0.0
    %287 = vmatprep.subr.mxu0 0.0
    %288 = vmatpush1.xpose.msra.mxu0 0.0
    %289 = vmatprep.subr.mxu0 0.0
    %290 = vmatpush1.xpose.msra.mxu0 0.0
    %291 = vmatprep.subr.mxu0 0.0
    %292 = vmatpush1.xpose.msra.mxu0 0.0
    %293 = vmatprep.subr.mxu0 0.0
    %294 = vmatpush1.xpose.msra.mxu0 0.0
    %295 = vmatprep.subr.mxu0 0.0
    %296 = vmatpush1.xpose.msra.mxu0 0.0
    %297 = vmatprep.subr.mxu0 0.0
    %298 = vmatpush1.xpose.msra.mxu0 0.0
    %299 = vmatprep.subr.mxu0 0.0
    %300 = vmatpush1.xpose.msra.mxu0 0.0
    %301 = vmatprep.subr.mxu0 0.0
    %302 = vmatpush1.xpose.msra.mxu0 0.0
    %303 = vmatprep.subr.mxu0 0.0
    %304 = vmatpush1.xpose.msra.mxu0 0.0
    %305 = vmatprep.subr.mxu0 0.0
    %306 = vmatpush1.xpose.msra.mxu0 0.0
    %307 = vmatprep.subr.mxu0 0.0
    %308 = vmatpush1.xpose.msra.mxu0 0.0
    %309 = vmatprep.subr.mxu0 0.0
    %310 = vmatpush1.xpose.msra.mxu0 0.0
    %311 = vmatprep.subr.mxu0 0.0
    %312 = vmatpush1.xpose.msra.mxu0 0.0
    %313 = vmatprep.subr.mxu0 0.0
    %314 = vmatpush1.xpose.msra.mxu0 0.0
    %315 = vmatprep.subr.mxu0 0.0
    %316 = vmatpush1.xpose.msra.mxu0 0.0
    %317 = vmatprep.subr.mxu0 0.0
    %318 = vmatpush1.xpose.msra.mxu0 0.0
    %319 = vmatprep.subr.mxu0 0.0
    %320 = vmatpush1.xpose.msra.mxu0 0.0
    %321 = vmatprep.mubr.f32.mxu0 0.0
    %322 = vmatmul.mubr.f32.gmra.mrb[0].mxu0 %v253
    %v323 = vpop.f32.mrb[0].mxu0
    %v324 = vadd.f32 0.0, %v323
    %v325 = vpop.f32.mrb[0].mxu0
    %326 = vdwg.mxu0
    %327 = vrot.lane.b32.xlu0 %v163, 96
    %v328 = vpop.permute.xlu0 %327
    %v329 = vsel %vm176, %v163, 0
    %v331 = vsel %vm176, %v328, 0
    %333 = vmatprep.subr.mxu0 0.0
    %334 = vmatpush1.xpose.msra.mxu0 %v331
    %335 = vmatprep.subr.mxu0 0.0
    %336 = vmatpush1.xpose.msra.mxu0 0.0
    %337 = vmatprep.subr.mxu0 0.0
    %338 = vmatpush1.xpose.msra.mxu0 0.0
    %339 = vmatprep.subr.mxu0 0.0
    %340 = vmatpush1.xpose.msra.mxu0 0.0
    %341 = vmatprep.subr.mxu0 0.0
    %342 = vmatpush1.xpose.msra.mxu0 0.0
    %343 = vmatprep.subr.mxu0 0.0
    %344 = vmatpush1.xpose.msra.mxu0 0.0
    %345 = vmatprep.subr.mxu0 0.0
    %346 = vmatpush1.xpose.msra.mxu0 0.0
    %347 = vmatprep.subr.mxu0 0.0
    %348 = vmatpush1.xpose.msra.mxu0 0.0
    %349 = vmatprep.subr.mxu0 0.0
    %350 = vmatpush1.xpose.msra.mxu0 0.0
    %351 = vmatprep.subr.mxu0 0.0
    %352 = vmatpush1.xpose.msra.mxu0 0.0
    %353 = vmatprep.subr.mxu0 0.0
    %354 = vmatpush1.xpose.msra.mxu0 0.0
    %355 = vmatprep.subr.mxu0 0.0
    %356 = vmatpush1.xpose.msra.mxu0 0.0
    %357 = vmatprep.subr.mxu0 0.0
    %358 = vmatpush1.xpose.msra.mxu0 0.0
    %359 = vmatprep.subr.mxu0 0.0
    %360 = vmatpush1.xpose.msra.mxu0 0.0
    %361 = vmatprep.subr.mxu0 0.0
    %362 = vmatpush1.xpose.msra.mxu0 0.0
    %363 = vmatprep.subr.mxu0 0.0
    %364 = vmatpush1.xpose.msra.mxu0 0.0
    %365 = vmatprep.subr.mxu0 0.0
    %366 = vmatpush1.xpose.msra.mxu0 0.0
    %367 = vmatprep.subr.mxu0 0.0
    %368 = vmatpush1.xpose.msra.mxu0 0.0
    %369 = vmatprep.subr.mxu0 0.0
    %370 = vmatpush1.xpose.msra.mxu0 0.0
    %371 = vmatprep.subr.mxu0 0.0
    %372 = vmatpush1.xpose.msra.mxu0 0.0
    %373 = vmatprep.subr.mxu0 0.0
    %374 = vmatpush1.xpose.msra.mxu0 0.0
    %375 = vmatprep.subr.mxu0 0.0
    %376 = vmatpush1.xpose.msra.mxu0 0.0
    %377 = vmatprep.subr.mxu0 0.0
    %378 = vmatpush1.xpose.msra.mxu0 0.0
    %379 = vmatprep.subr.mxu0 0.0
    %380 = vmatpush1.xpose.msra.mxu0 0.0
    %381 = vmatprep.subr.mxu0 0.0
    %382 = vmatpush1.xpose.msra.mxu0 0.0
    %383 = vmatprep.subr.mxu0 0.0
    %384 = vmatpush1.xpose.msra.mxu0 0.0
    %385 = vmatprep.subr.mxu0 0.0
    %386 = vmatpush1.xpose.msra.mxu0 0.0
    %387 = vmatprep.subr.mxu0 0.0
    %388 = vmatpush1.xpose.msra.mxu0 0.0
    %389 = vmatprep.subr.mxu0 0.0
    %390 = vmatpush1.xpose.msra.mxu0 0.0
    %391 = vmatprep.subr.mxu0 0.0
    %392 = vmatpush1.xpose.msra.mxu0 0.0
    %393 = vmatprep.subr.mxu0 0.0
    %394 = vmatpush1.xpose.msra.mxu0 0.0
    %395 = vmatprep.subr.mxu0 0.0
    %396 = vmatpush1.xpose.msra.mxu0 0.0
    %397 = vmatprep.mubr.f32.mxu0 0.0
    %398 = vmatmul.mubr.f32.gmra.mrb[0].mxu0 %v329
    %v399 = vpop.f32.mrb[0].mxu0
    %v400 = vadd.f32 0.0, %v399
    %v401 = vpop.f32.mrb[0].mxu0
    %402 = vdwg.mxu0
    %403 = vrot.lane.b32.xlu0 %v165, 96
    %v404 = vpop.permute.xlu0 %403
    %v405 = vsel %vm176, %v165, 0
    %v407 = vsel %vm176, %v404, 0
    %409 = vmatprep.subr.mxu0 0.0
    %410 = vmatpush1.xpose.msra.mxu0 %v407
    %411 = vmatprep.subr.mxu0 0.0
    %412 = vmatpush1.xpose.msra.mxu0 0.0
    %413 = vmatprep.subr.mxu0 0.0
    %414 = vmatpush1.xpose.msra.mxu0 0.0
    %415 = vmatprep.subr.mxu0 0.0
    %416 = vmatpush1.xpose.msra.mxu0 0.0
    %417 = vmatprep.subr.mxu0 0.0
    %418 = vmatpush1.xpose.msra.mxu0 0.0
    %419 = vmatprep.subr.mxu0 0.0
    %420 = vmatpush1.xpose.msra.mxu0 0.0
    %421 = vmatprep.subr.mxu0 0.0
    %422 = vmatpush1.xpose.msra.mxu0 0.0
    %423 = vmatprep.subr.mxu0 0.0
    %424 = vmatpush1.xpose.msra.mxu0 0.0
    %425 = vmatprep.subr.mxu0 0.0
    %426 = vmatpush1.xpose.msra.mxu0 0.0
    %427 = vmatprep.subr.mxu0 0.0
    %428 = vmatpush1.xpose.msra.mxu0 0.0
    %429 = vmatprep.subr.mxu0 0.0
    %430 = vmatpush1.xpose.msra.mxu0 0.0
    %431 = vmatprep.subr.mxu0 0.0
    %432 = vmatpush1.xpose.msra.mxu0 0.0
    %433 = vmatprep.subr.mxu0 0.0
    %434 = vmatpush1.xpose.msra.mxu0 0.0
    %435 = vmatprep.subr.mxu0 0.0
    %436 = vmatpush1.xpose.msra.mxu0 0.0
    %437 = vmatprep.subr.mxu0 0.0
    %438 = vmatpush1.xpose.msra.mxu0 0.0
    %439 = vmatprep.subr.mxu0 0.0
    %440 = vmatpush1.xpose.msra.mxu0 0.0
    %441 = vmatprep.subr.mxu0 0.0
    %442 = vmatpush1.xpose.msra.mxu0 0.0
    %443 = vmatprep.subr.mxu0 0.0
    %444 = vmatpush1.xpose.msra.mxu0 0.0
    %445 = vmatprep.subr.mxu0 0.0
    %446 = vmatpush1.xpose.msra.mxu0 0.0
    %447 = vmatprep.subr.mxu0 0.0
    %448 = vmatpush1.xpose.msra.mxu0 0.0
    %449 = vmatprep.subr.mxu0 0.0
    %450 = vmatpush1.xpose.msra.mxu0 0.0
    %451 = vmatprep.subr.mxu0 0.0
    %452 = vmatpush1.xpose.msra.mxu0 0.0
    %453 = vmatprep.subr.mxu0 0.0
    %454 = vmatpush1.xpose.msra.mxu0 0.0
    %455 = vmatprep.subr.mxu0 0.0
    %456 = vmatpush1.xpose.msra.mxu0 0.0
    %457 = vmatprep.subr.mxu0 0.0
    %458 = vmatpush1.xpose.msra.mxu0 0.0
    %459 = vmatprep.subr.mxu0 0.0
    %460 = vmatpush1.xpose.msra.mxu0 0.0
    %461 = vmatprep.subr.mxu0 0.0
    %462 = vmatpush1.xpose.msra.mxu0 0.0
    %463 = vmatprep.subr.mxu0 0.0
    %464 = vmatpush1.xpose.msra.mxu0 0.0
    %465 = vmatprep.subr.mxu0 0.0
    %466 = vmatpush1.xpose.msra.mxu0 0.0
    %467 = vmatprep.subr.mxu0 0.0
    %468 = vmatpush1.xpose.msra.mxu0 0.0
    %469 = vmatprep.subr.mxu0 0.0
    %470 = vmatpush1.xpose.msra.mxu0 0.0
    %471 = vmatprep.subr.mxu0 0.0
    %472 = vmatpush1.xpose.msra.mxu0 0.0
    %473 = vmatprep.mubr.f32.mxu0 0.0
    %474 = vmatmul.mubr.f32.gmra.mrb[0].mxu0 %v405
    %v475 = vpop.f32.mrb[0].mxu0
    %v476 = vadd.f32 0.0, %v475
    %v477 = vpop.f32.mrb[0].mxu0
    %478 = vdwg.mxu0
    %479 = vrot.lane.b32.xlu0 %v167, 96
    %v480 = vpop.permute.xlu0 %479
    %v481 = vsel %vm176, %v167, 0
    %v483 = vsel %vm176, %v480, 0
    %485 = vmatprep.subr.mxu0 0.0
    %486 = vmatpush1.xpose.msra.mxu0 %v483
    %487 = vmatprep.subr.mxu0 0.0
    %488 = vmatpush1.xpose.msra.mxu0 0.0
    %489 = vmatprep.subr.mxu0 0.0
    %490 = vmatpush1.xpose.msra.mxu0 0.0
    %491 = vmatprep.subr.mxu0 0.0
    %492 = vmatpush1.xpose.msra.mxu0 0.0
    %493 = vmatprep.subr.mxu0 0.0
    %494 = vmatpush1.xpose.msra.mxu0 0.0
    %495 = vmatprep.subr.mxu0 0.0
    %496 = vmatpush1.xpose.msra.mxu0 0.0
    %497 = vmatprep.subr.mxu0 0.0
    %498 = vmatpush1.xpose.msra.mxu0 0.0
    %499 = vmatprep.subr.mxu0 0.0
    %500 = vmatpush1.xpose.msra.mxu0 0.0
    %501 = vmatprep.subr.mxu0 0.0
    %502 = vmatpush1.xpose.msra.mxu0 0.0
    %503 = vmatprep.subr.mxu0 0.0
    %504 = vmatpush1.xpose.msra.mxu0 0.0
    %505 = vmatprep.subr.mxu0 0.0
    %506 = vmatpush1.xpose.msra.mxu0 0.0
    %507 = vmatprep.subr.mxu0 0.0
    %508 = vmatpush1.xpose.msra.mxu0 0.0
    %509 = vmatprep.subr.mxu0 0.0
    %510 = vmatpush1.xpose.msra.mxu0 0.0
    %511 = vmatprep.subr.mxu0 0.0
    %512 = vmatpush1.xpose.msra.mxu0 0.0
    %513 = vmatprep.subr.mxu0 0.0
    %514 = vmatpush1.xpose.msra.mxu0 0.0
    %515 = vmatprep.subr.mxu0 0.0
    %516 = vmatpush1.xpose.msra.mxu0 0.0
    %517 = vmatprep.subr.mxu0 0.0
    %518 = vmatpush1.xpose.msra.mxu0 0.0
    %519 = vmatprep.subr.mxu0 0.0
    %520 = vmatpush1.xpose.msra.mxu0 0.0
    %521 = vmatprep.subr.mxu0 0.0
    %522 = vmatpush1.xpose.msra.mxu0 0.0
    %523 = vmatprep.subr.mxu0 0.0
    %524 = vmatpush1.xpose.msra.mxu0 0.0
    %525 = vmatprep.subr.mxu0 0.0
    %526 = vmatpush1.xpose.msra.mxu0 0.0
    %527 = vmatprep.subr.mxu0 0.0
    %528 = vmatpush1.xpose.msra.mxu0 0.0
    %529 = vmatprep.subr.mxu0 0.0
    %530 = vmatpush1.xpose.msra.mxu0 0.0
    %531 = vmatprep.subr.mxu0 0.0
    %532 = vmatpush1.xpose.msra.mxu0 0.0
    %533 = vmatprep.subr.mxu0 0.0
    %534 = vmatpush1.xpose.msra.mxu0 0.0
    %535 = vmatprep.subr.mxu0 0.0
    %536 = vmatpush1.xpose.msra.mxu0 0.0
    %537 = vmatprep.subr.mxu0 0.0
    %538 = vmatpush1.xpose.msra.mxu0 0.0
    %539 = vmatprep.subr.mxu0 0.0
    %540 = vmatpush1.xpose.msra.mxu0 0.0
    %541 = vmatprep.subr.mxu0 0.0
    %542 = vmatpush1.xpose.msra.mxu0 0.0
    %543 = vmatprep.subr.mxu0 0.0
    %544 = vmatpush1.xpose.msra.mxu0 0.0
    %545 = vmatprep.subr.mxu0 0.0
    %546 = vmatpush1.xpose.msra.mxu0 0.0
    %547 = vmatprep.subr.mxu0 0.0
    %548 = vmatpush1.xpose.msra.mxu0 0.0
    %549 = vmatprep.mubr.f32.mxu0 0.0
    %550 = vmatmul.mubr.f32.gmra.mrb[0].mxu0 %v481
    %v551 = vpop.f32.mrb[0].mxu0
    %v552 = vadd.f32 0.0, %v551
    %v553 = vpop.f32.mrb[0].mxu0
    %554 = vdwg.mxu0
    %555 = vrot.lane.b32.xlu0 %v169, 96
    %v556 = vpop.permute.xlu0 %555
    %v557 = vsel %vm176, %v169, 0
    %v559 = vsel %vm176, %v556, 0
    %561 = vmatprep.subr.mxu0 0.0
    %562 = vmatpush1.xpose.msra.mxu0 %v559
    %563 = vmatprep.subr.mxu0 0.0
    %564 = vmatpush1.xpose.msra.mxu0 0.0
    %565 = vmatprep.subr.mxu0 0.0
    %566 = vmatpush1.xpose.msra.mxu0 0.0
    %567 = vmatprep.subr.mxu0 0.0
    %568 = vmatpush1.xpose.msra.mxu0 0.0
    %569 = vmatprep.subr.mxu0 0.0
    %570 = vmatpush1.xpose.msra.mxu0 0.0
    %571 = vmatprep.subr.mxu0 0.0
    %572 = vmatpush1.xpose.msra.mxu0 0.0
    %573 = vmatprep.subr.mxu0 0.0
    %574 = vmatpush1.xpose.msra.mxu0 0.0
    %575 = vmatprep.subr.mxu0 0.0
    %576 = vmatpush1.xpose.msra.mxu0 0.0
    %577 = vmatprep.subr.mxu0 0.0
    %578 = vmatpush1.xpose.msra.mxu0 0.0
    %579 = vmatprep.subr.mxu0 0.0
    %580 = vmatpush1.xpose.msra.mxu0 0.0
    %581 = vmatprep.subr.mxu0 0.0
    %582 = vmatpush1.xpose.msra.mxu0 0.0
    %583 = vmatprep.subr.mxu0 0.0
    %584 = vmatpush1.xpose.msra.mxu0 0.0
    %585 = vmatprep.subr.mxu0 0.0
    %586 = vmatpush1.xpose.msra.mxu0 0.0
    %587 = vmatprep.subr.mxu0 0.0
    %588 = vmatpush1.xpose.msra.mxu0 0.0
    %589 = vmatprep.subr.mxu0 0.0
    %590 = vmatpush1.xpose.msra.mxu0 0.0
    %591 = vmatprep.subr.mxu0 0.0
    %592 = vmatpush1.xpose.msra.mxu0 0.0
    %593 = vmatprep.subr.mxu0 0.0
    %594 = vmatpush1.xpose.msra.mxu0 0.0
    %595 = vmatprep.subr.mxu0 0.0
    %596 = vmatpush1.xpose.msra.mxu0 0.0
    %597 = vmatprep.subr.mxu0 0.0
    %598 = vmatpush1.xpose.msra.mxu0 0.0
    %599 = vmatprep.subr.mxu0 0.0
    %600 = vmatpush1.xpose.msra.mxu0 0.0
    %601 = vmatprep.subr.mxu0 0.0
    %602 = vmatpush1.xpose.msra.mxu0 0.0
    %603 = vmatprep.subr.mxu0 0.0
    %604 = vmatpush1.xpose.msra.mxu0 0.0
    %605 = vmatprep.subr.mxu0 0.0
    %606 = vmatpush1.xpose.msra.mxu0 0.0
    %607 = vmatprep.subr.mxu0 0.0
    %608 = vmatpush1.xpose.msra.mxu0 0.0
    %609 = vmatprep.subr.mxu0 0.0
    %610 = vmatpush1.xpose.msra.mxu0 0.0
    %611 = vmatprep.subr.mxu0 0.0
    %612 = vmatpush1.xpose.msra.mxu0 0.0
    %613 = vmatprep.subr.mxu0 0.0
    %614 = vmatpush1.xpose.msra.mxu0 0.0
    %615 = vmatprep.subr.mxu0 0.0
    %616 = vmatpush1.xpose.msra.mxu0 0.0
    %617 = vmatprep.subr.mxu0 0.0
    %618 = vmatpush1.xpose.msra.mxu0 0.0
    %619 = vmatprep.subr.mxu0 0.0
    %620 = vmatpush1.xpose.msra.mxu0 0.0
    %621 = vmatprep.subr.mxu0 0.0
    %622 = vmatpush1.xpose.msra.mxu0 0.0
    %623 = vmatprep.subr.mxu0 0.0
    %624 = vmatpush1.xpose.msra.mxu0 0.0
    %625 = vmatprep.mubr.f32.mxu0 0.0
    %626 = vmatmul.mubr.f32.gmra.mrb[0].mxu0 %v557
    %v627 = vpop.f32.mrb[0].mxu0
    %v628 = vadd.f32 0.0, %v627
    %v629 = vpop.f32.mrb[0].mxu0
    %630 = vdwg.mxu0
    %631 = vrot.lane.b32.xlu0 %v171, 96
    %v632 = vpop.permute.xlu0 %631
    %v633 = vsel %vm176, %v171, 0
    %v635 = vsel %vm176, %v632, 0
    %637 = vmatprep.subr.mxu0 0.0
    %638 = vmatpush1.xpose.msra.mxu0 %v635
    %639 = vmatprep.subr.mxu0 0.0
    %640 = vmatpush1.xpose.msra.mxu0 0.0
    %641 = vmatprep.subr.mxu0 0.0
    %642 = vmatpush1.xpose.msra.mxu0 0.0
    %643 = vmatprep.subr.mxu0 0.0
    %644 = vmatpush1.xpose.msra.mxu0 0.0
    %645 = vmatprep.subr.mxu0 0.0
    %646 = vmatpush1.xpose.msra.mxu0 0.0
    %647 = vmatprep.subr.mxu0 0.0
    %648 = vmatpush1.xpose.msra.mxu0 0.0
    %649 = vmatprep.subr.mxu0 0.0
    %650 = vmatpush1.xpose.msra.mxu0 0.0
    %651 = vmatprep.subr.mxu0 0.0
    %652 = vmatpush1.xpose.msra.mxu0 0.0
    %653 = vmatprep.subr.mxu0 0.0
    %654 = vmatpush1.xpose.msra.mxu0 0.0
    %655 = vmatprep.subr.mxu0 0.0
    %656 = vmatpush1.xpose.msra.mxu0 0.0
    %657 = vmatprep.subr.mxu0 0.0
    %658 = vmatpush1.xpose.msra.mxu0 0.0
    %659 = vmatprep.subr.mxu0 0.0
    %660 = vmatpush1.xpose.msra.mxu0 0.0
    %661 = vmatprep.subr.mxu0 0.0
    %662 = vmatpush1.xpose.msra.mxu0 0.0
    %663 = vmatprep.subr.mxu0 0.0
    %664 = vmatpush1.xpose.msra.mxu0 0.0
    %665 = vmatprep.subr.mxu0 0.0
    %666 = vmatpush1.xpose.msra.mxu0 0.0
    %667 = vmatprep.subr.mxu0 0.0
    %668 = vmatpush1.xpose.msra.mxu0 0.0
    %669 = vmatprep.subr.mxu0 0.0
    %670 = vmatpush1.xpose.msra.mxu0 0.0
    %671 = vmatprep.subr.mxu0 0.0
    %672 = vmatpush1.xpose.msra.mxu0 0.0
    %673 = vmatprep.subr.mxu0 0.0
    %674 = vmatpush1.xpose.msra.mxu0 0.0
    %675 = vmatprep.subr.mxu0 0.0
    %676 = vmatpush1.xpose.msra.mxu0 0.0
    %677 = vmatprep.subr.mxu0 0.0
    %678 = vmatpush1.xpose.msra.mxu0 0.0
    %679 = vmatprep.subr.mxu0 0.0
    %680 = vmatpush1.xpose.msra.mxu0 0.0
    %681 = vmatprep.subr.mxu0 0.0
    %682 = vmatpush1.xpose.msra.mxu0 0.0
    %683 = vmatprep.subr.mxu0 0.0
    %684 = vmatpush1.xpose.msra.mxu0 0.0
    %685 = vmatprep.subr.mxu0 0.0
    %686 = vmatpush1.xpose.msra.mxu0 0.0
    %687 = vmatprep.subr.mxu0 0.0
    %688 = vmatpush1.xpose.msra.mxu0 0.0
    %689 = vmatprep.subr.mxu0 0.0
    %690 = vmatpush1.xpose.msra.mxu0 0.0
    %691 = vmatprep.subr.mxu0 0.0
    %692 = vmatpush1.xpose.msra.mxu0 0.0
    %693 = vmatprep.subr.mxu0 0.0
    %694 = vmatpush1.xpose.msra.mxu0 0.0
    %695 = vmatprep.subr.mxu0 0.0
    %696 = vmatpush1.xpose.msra.mxu0 0.0
    %697 = vmatprep.subr.mxu0 0.0
    %698 = vmatpush1.xpose.msra.mxu0 0.0
    %699 = vmatprep.subr.mxu0 0.0
    %700 = vmatpush1.xpose.msra.mxu0 0.0
    %701 = vmatprep.mubr.f32.mxu0 0.0
    %702 = vmatmul.mubr.f32.gmra.mrb[0].mxu0 %v633
    %v703 = vpop.f32.mrb[0].mxu0
    %v704 = vadd.f32 0.0, %v703
    %v705 = vpop.f32.mrb[0].mxu0
    %706 = vdwg.mxu0
    %707 = vrot.lane.b32.xlu0 %v173, 96
    %v708 = vpop.permute.xlu0 %707
    %v709 = vsel %vm176, %v173, 0
    %v711 = vsel %vm176, %v708, 0
    %713 = vmatprep.subr.mxu0 0.0
    %714 = vmatpush1.xpose.msra.mxu0 %v711
    %715 = vmatprep.subr.mxu0 0.0
    %716 = vmatpush1.xpose.msra.mxu0 0.0
    %717 = vmatprep.subr.mxu0 0.0
    %718 = vmatpush1.xpose.msra.mxu0 0.0
    %719 = vmatprep.subr.mxu0 0.0
    %720 = vmatpush1.xpose.msra.mxu0 0.0
    %721 = vmatprep.subr.mxu0 0.0
    %722 = vmatpush1.xpose.msra.mxu0 0.0
    %723 = vmatprep.subr.mxu0 0.0
    %724 = vmatpush1.xpose.msra.mxu0 0.0
    %725 = vmatprep.subr.mxu0 0.0
    %726 = vmatpush1.xpose.msra.mxu0 0.0
    %727 = vmatprep.subr.mxu0 0.0
    %728 = vmatpush1.xpose.msra.mxu0 0.0
    %729 = vmatprep.subr.mxu0 0.0
    %730 = vmatpush1.xpose.msra.mxu0 0.0
    %731 = vmatprep.subr.mxu0 0.0
    %732 = vmatpush1.xpose.msra.mxu0 0.0
    %733 = vmatprep.subr.mxu0 0.0
    %734 = vmatpush1.xpose.msra.mxu0 0.0
    %735 = vmatprep.subr.mxu0 0.0
    %736 = vmatpush1.xpose.msra.mxu0 0.0
    %737 = vmatprep.subr.mxu0 0.0
    %738 = vmatpush1.xpose.msra.mxu0 0.0
    %739 = vmatprep.subr.mxu0 0.0
    %740 = vmatpush1.xpose.msra.mxu0 0.0
    %741 = vmatprep.subr.mxu0 0.0
    %742 = vmatpush1.xpose.msra.mxu0 0.0
    %743 = vmatprep.subr.mxu0 0.0
    %744 = vmatpush1.xpose.msra.mxu0 0.0
    %745 = vmatprep.subr.mxu0 0.0
    %746 = vmatpush1.xpose.msra.mxu0 0.0
    %747 = vmatprep.subr.mxu0 0.0
    %748 = vmatpush1.xpose.msra.mxu0 0.0
    %749 = vmatprep.subr.mxu0 0.0
    %750 = vmatpush1.xpose.msra.mxu0 0.0
    %751 = vmatprep.subr.mxu0 0.0
    %752 = vmatpush1.xpose.msra.mxu0 0.0
    %753 = vmatprep.subr.mxu0 0.0
    %754 = vmatpush1.xpose.msra.mxu0 0.0
    %755 = vmatprep.subr.mxu0 0.0
    %756 = vmatpush1.xpose.msra.mxu0 0.0
    %757 = vmatprep.subr.mxu0 0.0
    %758 = vmatpush1.xpose.msra.mxu0 0.0
    %759 = vmatprep.subr.mxu0 0.0
    %760 = vmatpush1.xpose.msra.mxu0 0.0
    %761 = vmatprep.subr.mxu0 0.0
    %762 = vmatpush1.xpose.msra.mxu0 0.0
    %763 = vmatprep.subr.mxu0 0.0
    %764 = vmatpush1.xpose.msra.mxu0 0.0
    %765 = vmatprep.subr.mxu0 0.0
    %766 = vmatpush1.xpose.msra.mxu0 0.0
    %767 = vmatprep.subr.mxu0 0.0
    %768 = vmatpush1.xpose.msra.mxu0 0.0
    %769 = vmatprep.subr.mxu0 0.0
    %770 = vmatpush1.xpose.msra.mxu0 0.0
    %771 = vmatprep.subr.mxu0 0.0
    %772 = vmatpush1.xpose.msra.mxu0 0.0
    %773 = vmatprep.subr.mxu0 0.0
    %774 = vmatpush1.xpose.msra.mxu0 0.0
    %775 = vmatprep.subr.mxu0 0.0
    %776 = vmatpush1.xpose.msra.mxu0 0.0
    %777 = vmatprep.mubr.f32.mxu0 0.0
    %778 = vmatmul.mubr.f32.gmra.mrb[0].mxu0 %v709
    %v779 = vpop.f32.mrb[0].mxu0
    %v780 = vadd.f32 0.0, %v779
    %v781 = vpop.f32.mrb[0].mxu0
    %782 = vdwg.mxu0
    %v783 = vmul.f32 %v248, 0.35355338
    %v784 = vmul.f32 %v324, 0.35355338
    %v785 = vmul.f32 %v400, 0.35355338
    %v786 = vmul.f32 %v476, 0.35355338
    %v787 = vmul.f32 %v552, 0.35355338
    %v788 = vmul.f32 %v628, 0.35355338
    %v789 = vmul.f32 %v704, 0.35355338
    %v790 = vmul.f32 %v780, 0.35355338
    %v791 = vld [vmem:[%s1] sm:$0x1]
    %v792 = vld [vmem:[%s1 + $0x1] sm:$0x1]
    %v795 = vlaneseq
    %v796 = vshrl.u32 %v795, 7
    %v797 = vsub.s32 0, %v796
    %v798 = vrot.slane %v791, %v797
    %v799 = vlaneseq
    %v800 = vshrl.u32 %v799, 7
    %v801 = vsub.s32 0, %v800
    %v802 = vrot.slane %v792, %v801
    %v805 = vadd.f32 %v783, %v798
    %v806 = vadd.f32 %v784, %v802
    %v807 = vadd.f32 %v785, %v798
    %v808 = vadd.f32 %v786, %v802
    %v809 = vadd.f32 %v787, %v798
    %v810 = vadd.f32 %v788, %v802
    %v811 = vadd.f32 %v789, %v798
    %v812 = vadd.f32 %v790, %v802
    %v813 = vsel %vm176, %v805, -inf
    %814 = vmax.xlane.f32.xlu0 %v813
    %v815 = vpop.xlane.xlu0 %814
    %v816 = vsel %vm176, %v806, -inf
    %817 = vmax.xlane.f32.xlu0 %v816
    %v818 = vpop.xlane.xlu0 %817
    %v819 = vsel %vm176, %v807, -inf
    %820 = vmax.xlane.f32.xlu0 %v819
    %v821 = vpop.xlane.xlu0 %820
    %v822 = vsel %vm176, %v808, -inf
    %823 = vmax.xlane.f32.xlu0 %v822
    %v824 = vpop.xlane.xlu0 %823
    %v825 = vsel %vm176, %v809, -inf
    %826 = vmax.xlane.f32.xlu0 %v825
    %v827 = vpop.xlane.xlu0 %826
    %v828 = vsel %vm176, %v810, -inf
    %829 = vmax.xlane.f32.xlu0 %v828
    %v830 = vpop.xlane.xlu0 %829
    %v831 = vsel %vm176, %v811, -inf
    %832 = vmax.xlane.f32.xlu0 %v831
    %v833 = vpop.xlane.xlu0 %832
    %v834 = vsel %vm176, %v812, -inf
    %835 = vmax.xlane.f32.xlu0 %v834
    %v836 = vpop.xlane.xlu0 %835
    %v837 = vsub.f32 %v805, %v815
    %v838 = vsub.f32 %v806, %v818
    %v839 = vsub.f32 %v807, %v821
    %v840 = vsub.f32 %v808, %v824
    %v841 = vsub.f32 %v809, %v827
    %v842 = vsub.f32 %v810, %v830
    %v843 = vsub.f32 %v811, %v833
    %v844 = vsub.f32 %v812, %v836
    %v845 = vmul.f32 %v837, 1.442695
    %v846 = vpow.pop %v845
    %v847 = vmul.f32 %v838, 1.442695
    %v848 = vpow.pop %v847
    %v849 = vmul.f32 %v839, 1.442695
    %v850 = vpow.pop %v849
    %v851 = vmul.f32 %v840, 1.442695
    %v852 = vpow.pop %v851
    %v853 = vmul.f32 %v841, 1.442695
    %v854 = vpow.pop %v853
    %v855 = vmul.f32 %v842, 1.442695
    %v856 = vpow.pop %v855
    %v857 = vmul.f32 %v843, 1.442695
    %v858 = vpow.pop %v857
    %v859 = vmul.f32 %v844, 1.442695
    %v860 = vpow.pop %v859
    %v861 = vsel %vm176, %v846, 0.0
    %862 = vadd.xlane.f32.xlu0 %v861
    %v863 = vpop.xlane.xlu0 %862
    %v864 = vsel %vm176, %v848, 0.0
    %865 = vadd.xlane.f32.xlu0 %v864
    %v866 = vpop.xlane.xlu0 %865
    %v867 = vsel %vm176, %v850, 0.0
    %868 = vadd.xlane.f32.xlu0 %v867
    %v869 = vpop.xlane.xlu0 %868
    %v870 = vsel %vm176, %v852, 0.0
    %871 = vadd.xlane.f32.xlu0 %v870
    %v872 = vpop.xlane.xlu0 %871
    %v873 = vsel %vm176, %v854, 0.0
    %874 = vadd.xlane.f32.xlu0 %v873
    %v875 = vpop.xlane.xlu0 %874
    %v876 = vsel %vm176, %v856, 0.0
    %877 = vadd.xlane.f32.xlu0 %v876
    %v878 = vpop.xlane.xlu0 %877
    %v879 = vsel %vm176, %v858, 0.0
    %880 = vadd.xlane.f32.xlu0 %v879
    %v881 = vpop.xlane.xlu0 %880
    %v882 = vsel %vm176, %v860, 0.0
    %883 = vadd.xlane.f32.xlu0 %v882
    %v884 = vpop.xlane.xlu0 %883
    %v885 = vrcp.pop %v863
    %v886 = vmul.f32 %v846, %v885
    %v887 = vrcp.pop %v866
    %v888 = vmul.f32 %v848, %v887
    %v889 = vrcp.pop %v869
    %v890 = vmul.f32 %v850, %v889
    %v891 = vrcp.pop %v872
    %v892 = vmul.f32 %v852, %v891
    %v893 = vrcp.pop %v875
    %v894 = vmul.f32 %v854, %v893
    %v895 = vrcp.pop %v878
    %v896 = vmul.f32 %v856, %v895
    %v897 = vrcp.pop %v881
    %v898 = vmul.f32 %v858, %v897
    %v899 = vrcp.pop %v884
    %v900 = vmul.f32 %v860, %v899
    %901 = vrot.lane.b32.xlu0 %v152, 64
    %v902 = vpop.permute.xlu0 %901
    %v905 = vsel %vm176, %v886, 0
    %907 = vmatprep.subr.mxu0 0.0
    %908 = vmatpush1.msra.mxu0 %v902
    %909 = vmatprep.subr.mxu0 0.0
    %910 = vmatpush1.msra.mxu0 0.0
    %911 = vmatprep.subr.mxu0 0.0
    %912 = vmatpush1.msra.mxu0 0.0
    %913 = vmatprep.subr.mxu0 0.0
    %914 = vmatpush1.msra.mxu0 0.0
    %915 = vmatprep.subr.mxu0 0.0
    %916 = vmatpush1.msra.mxu0 0.0
    %917 = vmatprep.subr.mxu0 0.0
    %918 = vmatpush1.msra.mxu0 0.0
    %919 = vmatprep.subr.mxu0 0.0
    %920 = vmatpush1.msra.mxu0 0.0
    %921 = vmatprep.subr.mxu0 0.0
    %922 = vmatpush1.msra.mxu0 0.0
    %923 = vmatprep.subr.mxu0 0.0
    %924 = vmatpush1.msra.mxu0 0.0
    %925 = vmatprep.subr.mxu0 0.0
    %926 = vmatpush1.msra.mxu0 0.0
    %927 = vmatprep.subr.mxu0 0.0
    %928 = vmatpush1.msra.mxu0 0.0
    %929 = vmatprep.subr.mxu0 0.0
    %930 = vmatpush1.msra.mxu0 0.0
    %931 = vmatprep.subr.mxu0 0.0
    %932 = vmatpush1.msra.mxu0 0.0
    %933 = vmatprep.subr.mxu0 0.0
    %934 = vmatpush1.msra.mxu0 0.0
    %935 = vmatprep.subr.mxu0 0.0
    %936 = vmatpush1.msra.mxu0 0.0
    %937 = vmatprep.subr.mxu0 0.0
    %938 = vmatpush1.msra.mxu0 0.0
    %939 = vmatprep.subr.mxu0 0.0
    %940 = vmatpush1.msra.mxu0 0.0
    %941 = vmatprep.subr.mxu0 0.0
    %942 = vmatpush1.msra.mxu0 0.0
    %943 = vmatprep.subr.mxu0 0.0
    %944 = vmatpush1.msra.mxu0 0.0
    %945 = vmatprep.subr.mxu0 0.0
    %946 = vmatpush1.msra.mxu0 0.0
    %947 = vmatprep.subr.mxu0 0.0
    %948 = vmatpush1.msra.mxu0 0.0
    %949 = vmatprep.subr.mxu0 0.0
    %950 = vmatpush1.msra.mxu0 0.0
    %951 = vmatprep.subr.mxu0 0.0
    %952 = vmatpush1.msra.mxu0 0.0
    %953 = vmatprep.subr.mxu0 0.0
    %954 = vmatpush1.msra.mxu0 0.0
    %955 = vmatprep.subr.mxu0 0.0
    %956 = vmatpush1.msra.mxu0 0.0
    %957 = vmatprep.subr.mxu0 0.0
    %958 = vmatpush1.msra.mxu0 0.0
    %959 = vmatprep.subr.mxu0 0.0
    %960 = vmatpush1.msra.mxu0 0.0
    %961 = vmatprep.subr.mxu0 0.0
    %962 = vmatpush1.msra.mxu0 0.0
    %963 = vmatprep.subr.mxu0 0.0
    %964 = vmatpush1.msra.mxu0 0.0
    %965 = vmatprep.subr.mxu0 0.0
    %966 = vmatpush1.msra.mxu0 0.0
    %967 = vmatprep.subr.mxu0 0.0
    %968 = vmatpush1.msra.mxu0 0.0
    %969 = vmatprep.subr.mxu0 0.0
    %970 = vmatpush1.msra.mxu0 0.0
    %971 = vmatprep.mubr.f32.mxu0 0.0
    %972 = vmatmul.mubr.f32.gmra.mrb[0].mxu0 %v905
    %v973 = vpop.f32.mrb[0].mxu0
    %v974 = vadd.f32 0.0, %v973
    %v975 = vpop.f32.mrb[0].mxu0
    %976 = vdwg.mxu0
    %977 = vrot.lane.b32.xlu0 %v157, 64
    %v978 = vpop.permute.xlu0 %977
    %v981 = vsel %vm176, %v888, 0
    %983 = vmatprep.subr.mxu0 0.0
    %984 = vmatpush1.msra.mxu0 %v978
    %985 = vmatprep.subr.mxu0 0.0
    %986 = vmatpush1.msra.mxu0 0.0
    %987 = vmatprep.subr.mxu0 0.0
    %988 = vmatpush1.msra.mxu0 0.0
    %989 = vmatprep.subr.mxu0 0.0
    %990 = vmatpush1.msra.mxu0 0.0
    %991 = vmatprep.subr.mxu0 0.0
    %992 = vmatpush1.msra.mxu0 0.0
    %993 = vmatprep.subr.mxu0 0.0
    %994 = vmatpush1.msra.mxu0 0.0
    %995 = vmatprep.subr.mxu0 0.0
    %996 = vmatpush1.msra.mxu0 0.0
    %997 = vmatprep.subr.mxu0 0.0
    %998 = vmatpush1.msra.mxu0 0.0
    %999 = vmatprep.subr.mxu0 0.0
    %1000 = vmatpush1.msra.mxu0 0.0
    %1001 = vmatprep.subr.mxu0 0.0
    %1002 = vmatpush1.msra.mxu0 0.0
    %1003 = vmatprep.subr.mxu0 0.0
    %1004 = vmatpush1.msra.mxu0 0.0
    %1005 = vmatprep.subr.mxu0 0.0
    %1006 = vmatpush1.msra.mxu0 0.0
    %1007 = vmatprep.subr.mxu0 0.0
    %1008 = vmatpush1.msra.mxu0 0.0
    %1009 = vmatprep.subr.mxu0 0.0
    %1010 = vmatpush1.msra.mxu0 0.0
    %1011 = vmatprep.subr.mxu0 0.0
    %1012 = vmatpush1.msra.mxu0 0.0
    %1013 = vmatprep.subr.mxu0 0.0
    %1014 = vmatpush1.msra.mxu0 0.0
    %1015 = vmatprep.subr.mxu0 0.0
    %1016 = vmatpush1.msra.mxu0 0.0
    %1017 = vmatprep.subr.mxu0 0.0
    %1018 = vmatpush1.msra.mxu0 0.0
    %1019 = vmatprep.subr.mxu0 0.0
    %1020 = vmatpush1.msra.mxu0 0.0
    %1021 = vmatprep.subr.mxu0 0.0
    %1022 = vmatpush1.msra.mxu0 0.0
    %1023 = vmatprep.subr.mxu0 0.0
    %1024 = vmatpush1.msra.mxu0 0.0
    %1025 = vmatprep.subr.mxu0 0.0
    %1026 = vmatpush1.msra.mxu0 0.0
    %1027 = vmatprep.subr.mxu0 0.0
    %1028 = vmatpush1.msra.mxu0 0.0
    %1029 = vmatprep.subr.mxu0 0.0
    %1030 = vmatpush1.msra.mxu0 0.0
    %1031 = vmatprep.subr.mxu0 0.0
    %1032 = vmatpush1.msra.mxu0 0.0
    %1033 = vmatprep.subr.mxu0 0.0
    %1034 = vmatpush1.msra.mxu0 0.0
    %1035 = vmatprep.subr.mxu0 0.0
    %1036 = vmatpush1.msra.mxu0 0.0
    %1037 = vmatprep.subr.mxu0 0.0
    %1038 = vmatpush1.msra.mxu0 0.0
    %1039 = vmatprep.subr.mxu0 0.0
    %1040 = vmatpush1.msra.mxu0 0.0
    %1041 = vmatprep.subr.mxu0 0.0
    %1042 = vmatpush1.msra.mxu0 0.0
    %1043 = vmatprep.subr.mxu0 0.0
    %1044 = vmatpush1.msra.mxu0 0.0
    %1045 = vmatprep.subr.mxu0 0.0
    %1046 = vmatpush1.msra.mxu0 0.0
    %1047 = vmatprep.mubr.f32.mxu0 0.0
    %1048 = vmatmul.mubr.f32.gmra.mrb[0].mxu0 %v981
    %v1049 = vpop.f32.mrb[0].mxu0
    %v1050 = vadd.f32 0.0, %v1049
    %v1051 = vpop.f32.mrb[0].mxu0
    %1052 = vdwg.mxu0
    %1053 = vrot.lane.b32.xlu0 %v163, 64
    %v1054 = vpop.permute.xlu0 %1053
    %v1057 = vsel %vm176, %v890, 0
    %1059 = vmatprep.subr.mxu0 0.0
    %1060 = vmatpush1.msra.mxu0 %v1054
    %1061 = vmatprep.subr.mxu0 0.0
    %1062 = vmatpush1.msra.mxu0 0.0
    %1063 = vmatprep.subr.mxu0 0.0
    %1064 = vmatpush1.msra.mxu0 0.0
    %1065 = vmatprep.subr.mxu0 0.0
    %1066 = vmatpush1.msra.mxu0 0.0
    %1067 = vmatprep.subr.mxu0 0.0
    %1068 = vmatpush1.msra.mxu0 0.0
    %1069 = vmatprep.subr.mxu0 0.0
    %1070 = vmatpush1.msra.mxu0 0.0
    %1071 = vmatprep.subr.mxu0 0.0
    %1072 = vmatpush1.msra.mxu0 0.0
    %1073 = vmatprep.subr.mxu0 0.0
    %1074 = vmatpush1.msra.mxu0 0.0
    %1075 = vmatprep.subr.mxu0 0.0
    %1076 = vmatpush1.msra.mxu0 0.0
    %1077 = vmatprep.subr.mxu0 0.0
    %1078 = vmatpush1.msra.mxu0 0.0
    %1079 = vmatprep.subr.mxu0 0.0
    %1080 = vmatpush1.msra.mxu0 0.0
    %1081 = vmatprep.subr.mxu0 0.0
    %1082 = vmatpush1.msra.mxu0 0.0
    %1083 = vmatprep.subr.mxu0 0.0
    %1084 = vmatpush1.msra.mxu0 0.0
    %1085 = vmatprep.subr.mxu0 0.0
    %1086 = vmatpush1.msra.mxu0 0.0
    %1087 = vmatprep.subr.mxu0 0.0
    %1088 = vmatpush1.msra.mxu0 0.0
    %1089 = vmatprep.subr.mxu0 0.0
    %1090 = vmatpush1.msra.mxu0 0.0
    %1091 = vmatprep.subr.mxu0 0.0
    %1092 = vmatpush1.msra.mxu0 0.0
    %1093 = vmatprep.subr.mxu0 0.0
    %1094 = vmatpush1.msra.mxu0 0.0
    %1095 = vmatprep.subr.mxu0 0.0
    %1096 = vmatpush1.msra.mxu0 0.0
    %1097 = vmatprep.subr.mxu0 0.0
    %1098 = vmatpush1.msra.mxu0 0.0
    %1099 = vmatprep.subr.mxu0 0.0
    %1100 = vmatpush1.msra.mxu0 0.0
    %1101 = vmatprep.subr.mxu0 0.0
    %1102 = vmatpush1.msra.mxu0 0.0
    %1103 = vmatprep.subr.mxu0 0.0
    %1104 = vmatpush1.msra.mxu0 0.0
    %1105 = vmatprep.subr.mxu0 0.0
    %1106 = vmatpush1.msra.mxu0 0.0
    %1107 = vmatprep.subr.mxu0 0.0
    %1108 = vmatpush1.msra.mxu0 0.0
    %1109 = vmatprep.subr.mxu0 0.0
    %1110 = vmatpush1.msra.mxu0 0.0
    %1111 = vmatprep.subr.mxu0 0.0
    %1112 = vmatpush1.msra.mxu0 0.0
    %1113 = vmatprep.subr.mxu0 0.0
    %1114 = vmatpush1.msra.mxu0 0.0
    %1115 = vmatprep.subr.mxu0 0.0
    %1116 = vmatpush1.msra.mxu0 0.0
    %1117 = vmatprep.subr.mxu0 0.0
    %1118 = vmatpush1.msra.mxu0 0.0
    %1119 = vmatprep.subr.mxu0 0.0
    %1120 = vmatpush1.msra.mxu0 0.0
    %1121 = vmatprep.subr.mxu0 0.0
    %1122 = vmatpush1.msra.mxu0 0.0
    %1123 = vmatprep.mubr.f32.mxu0 0.0
    %1124 = vmatmul.mubr.f32.gmra.mrb[0].mxu0 %v1057
    %v1125 = vpop.f32.mrb[0].mxu0
    %v1126 = vadd.f32 0.0, %v1125
    %v1127 = vpop.f32.mrb[0].mxu0
    %1128 = vdwg.mxu0
    %1129 = vrot.lane.b32.xlu0 %v165, 64
    %v1130 = vpop.permute.xlu0 %1129
    %v1133 = vsel %vm176, %v892, 0
    %1135 = vmatprep.subr.mxu0 0.0
    %1136 = vmatpush1.msra.mxu0 %v1130
    %1137 = vmatprep.subr.mxu0 0.0
    %1138 = vmatpush1.msra.mxu0 0.0
    %1139 = vmatprep.subr.mxu0 0.0
    %1140 = vmatpush1.msra.mxu0 0.0
    %1141 = vmatprep.subr.mxu0 0.0
    %1142 = vmatpush1.msra.mxu0 0.0
    %1143 = vmatprep.subr.mxu0 0.0
    %1144 = vmatpush1.msra.mxu0 0.0
    %1145 = vmatprep.subr.mxu0 0.0
    %1146 = vmatpush1.msra.mxu0 0.0
    %1147 = vmatprep.subr.mxu0 0.0
    %1148 = vmatpush1.msra.mxu0 0.0
    %1149 = vmatprep.subr.mxu0 0.0
    %1150 = vmatpush1.msra.mxu0 0.0
    %1151 = vmatprep.subr.mxu0 0.0
    %1152 = vmatpush1.msra.mxu0 0.0
    %1153 = vmatprep.subr.mxu0 0.0
    %1154 = vmatpush1.msra.mxu0 0.0
    %1155 = vmatprep.subr.mxu0 0.0
    %1156 = vmatpush1.msra.mxu0 0.0
    %1157 = vmatprep.subr.mxu0 0.0
    %1158 = vmatpush1.msra.mxu0 0.0
    %1159 = vmatprep.subr.mxu0 0.0
    %1160 = vmatpush1.msra.mxu0 0.0
    %1161 = vmatprep.subr.mxu0 0.0
    %1162 = vmatpush1.msra.mxu0 0.0
    %1163 = vmatprep.subr.mxu0 0.0
    %1164 = vmatpush1.msra.mxu0 0.0
    %1165 = vmatprep.subr.mxu0 0.0
    %1166 = vmatpush1.msra.mxu0 0.0
    %1167 = vmatprep.subr.mxu0 0.0
    %1168 = vmatpush1.msra.mxu0 0.0
    %1169 = vmatprep.subr.mxu0 0.0
    %1170 = vmatpush1.msra.mxu0 0.0
    %1171 = vmatprep.subr.mxu0 0.0
    %1172 = vmatpush1.msra.mxu0 0.0
    %1173 = vmatprep.subr.mxu0 0.0
    %1174 = vmatpush1.msra.mxu0 0.0
    %1175 = vmatprep.subr.mxu0 0.0
    %1176 = vmatpush1.msra.mxu0 0.0
    %1177 = vmatprep.subr.mxu0 0.0
    %1178 = vmatpush1.msra.mxu0 0.0
    %1179 = vmatprep.subr.mxu0 0.0
    %1180 = vmatpush1.msra.mxu0 0.0
    %1181 = vmatprep.subr.mxu0 0.0
    %1182 = vmatpush1.msra.mxu0 0.0
    %1183 = vmatprep.subr.mxu0 0.0
    %1184 = vmatpush1.msra.mxu0 0.0
    %1185 = vmatprep.subr.mxu0 0.0
    %1186 = vmatpush1.msra.mxu0 0.0
    %1187 = vmatprep.subr.mxu0 0.0
    %1188 = vmatpush1.msra.mxu0 0.0
    %1189 = vmatprep.subr.mxu0 0.0
    %1190 = vmatpush1.msra.mxu0 0.0
    %1191 = vmatprep.subr.mxu0 0.0
    %1192 = vmatpush1.msra.mxu0 0.0
    %1193 = vmatprep.subr.mxu0 0.0
    %1194 = vmatpush1.msra.mxu0 0.0
    %1195 = vmatprep.subr.mxu0 0.0
    %1196 = vmatpush1.msra.mxu0 0.0
    %1197 = vmatprep.subr.mxu0 0.0
    %1198 = vmatpush1.msra.mxu0 0.0
    %1199 = vmatprep.mubr.f32.mxu0 0.0
    %1200 = vmatmul.mubr.f32.gmra.mrb[0].mxu0 %v1133
    %v1201 = vpop.f32.mrb[0].mxu0
    %v1202 = vadd.f32 0.0, %v1201
    %v1203 = vpop.f32.mrb[0].mxu0
    %1204 = vdwg.mxu0
    %1205 = vrot.lane.b32.xlu0 %v167, 64
    %v1206 = vpop.permute.xlu0 %1205
    %v1209 = vsel %vm176, %v894, 0
    %1211 = vmatprep.subr.mxu0 0.0
    %1212 = vmatpush1.msra.mxu0 %v1206
    %1213 = vmatprep.subr.mxu0 0.0
    %1214 = vmatpush1.msra.mxu0 0.0
    %1215 = vmatprep.subr.mxu0 0.0
    %1216 = vmatpush1.msra.mxu0 0.0
    %1217 = vmatprep.subr.mxu0 0.0
    %1218 = vmatpush1.msra.mxu0 0.0
    %1219 = vmatprep.subr.mxu0 0.0
    %1220 = vmatpush1.msra.mxu0 0.0
    %1221 = vmatprep.subr.mxu0 0.0
    %1222 = vmatpush1.msra.mxu0 0.0
    %1223 = vmatprep.subr.mxu0 0.0
    %1224 = vmatpush1.msra.mxu0 0.0
    %1225 = vmatprep.subr.mxu0 0.0
    %1226 = vmatpush1.msra.mxu0 0.0
    %1227 = vmatprep.subr.mxu0 0.0
    %1228 = vmatpush1.msra.mxu0 0.0
    %1229 = vmatprep.subr.mxu0 0.0
    %1230 = vmatpush1.msra.mxu0 0.0
    %1231 = vmatprep.subr.mxu0 0.0
    %1232 = vmatpush1.msra.mxu0 0.0
    %1233 = vmatprep.subr.mxu0 0.0
    %1234 = vmatpush1.msra.mxu0 0.0
    %1235 = vmatprep.subr.mxu0 0.0
    %1236 = vmatpush1.msra.mxu0 0.0
    %1237 = vmatprep.subr.mxu0 0.0
    %1238 = vmatpush1.msra.mxu0 0.0
    %1239 = vmatprep.subr.mxu0 0.0
    %1240 = vmatpush1.msra.mxu0 0.0
    %1241 = vmatprep.subr.mxu0 0.0
    %1242 = vmatpush1.msra.mxu0 0.0
    %1243 = vmatprep.subr.mxu0 0.0
    %1244 = vmatpush1.msra.mxu0 0.0
    %1245 = vmatprep.subr.mxu0 0.0
    %1246 = vmatpush1.msra.mxu0 0.0
    %1247 = vmatprep.subr.mxu0 0.0
    %1248 = vmatpush1.msra.mxu0 0.0
    %1249 = vmatprep.subr.mxu0 0.0
    %1250 = vmatpush1.msra.mxu0 0.0
    %1251 = vmatprep.subr.mxu0 0.0
    %1252 = vmatpush1.msra.mxu0 0.0
    %1253 = vmatprep.subr.mxu0 0.0
    %1254 = vmatpush1.msra.mxu0 0.0
    %1255 = vmatprep.subr.mxu0 0.0
    %1256 = vmatpush1.msra.mxu0 0.0
    %1257 = vmatprep.subr.mxu0 0.0
    %1258 = vmatpush1.msra.mxu0 0.0
    %1259 = vmatprep.subr.mxu0 0.0
    %1260 = vmatpush1.msra.mxu0 0.0
    %1261 = vmatprep.subr.mxu0 0.0
    %1262 = vmatpush1.msra.mxu0 0.0
    %1263 = vmatprep.subr.mxu0 0.0
    %1264 = vmatpush1.msra.mxu0 0.0
    %1265 = vmatprep.subr.mxu0 0.0
    %1266 = vmatpush1.msra.mxu0 0.0
    %1267 = vmatprep.subr.mxu0 0.0
    %1268 = vmatpush1.msra.mxu0 0.0
    %1269 = vmatprep.subr.mxu0 0.0
    %1270 = vmatpush1.msra.mxu0 0.0
    %1271 = vmatprep.subr.mxu0 0.0
    %1272 = vmatpush1.msra.mxu0 0.0
    %1273 = vmatprep.subr.mxu0 0.0
    %1274 = vmatpush1.msra.mxu0 0.0
    %1275 = vmatprep.mubr.f32.mxu0 0.0
    %1276 = vmatmul.mubr.f32.gmra.mrb[0].mxu0 %v1209
    %v1277 = vpop.f32.mrb[0].mxu0
    %v1278 = vadd.f32 0.0, %v1277
    %v1279 = vpop.f32.mrb[0].mxu0
    %1280 = vdwg.mxu0
    %1281 = vrot.lane.b32.xlu0 %v169, 64
    %v1282 = vpop.permute.xlu0 %1281
    %v1285 = vsel %vm176, %v896, 0
    %1287 = vmatprep.subr.mxu0 0.0
    %1288 = vmatpush1.msra.mxu0 %v1282
    %1289 = vmatprep.subr.mxu0 0.0
    %1290 = vmatpush1.msra.mxu0 0.0
    %1291 = vmatprep.subr.mxu0 0.0
    %1292 = vmatpush1.msra.mxu0 0.0
    %1293 = vmatprep.subr.mxu0 0.0
    %1294 = vmatpush1.msra.mxu0 0.0
    %1295 = vmatprep.subr.mxu0 0.0
    %1296 = vmatpush1.msra.mxu0 0.0
    %1297 = vmatprep.subr.mxu0 0.0
    %1298 = vmatpush1.msra.mxu0 0.0
    %1299 = vmatprep.subr.mxu0 0.0
    %1300 = vmatpush1.msra.mxu0 0.0
    %1301 = vmatprep.subr.mxu0 0.0
    %1302 = vmatpush1.msra.mxu0 0.0
    %1303 = vmatprep.subr.mxu0 0.0
    %1304 = vmatpush1.msra.mxu0 0.0
    %1305 = vmatprep.subr.mxu0 0.0
    %1306 = vmatpush1.msra.mxu0 0.0
    %1307 = vmatprep.subr.mxu0 0.0
    %1308 = vmatpush1.msra.mxu0 0.0
    %1309 = vmatprep.subr.mxu0 0.0
    %1310 = vmatpush1.msra.mxu0 0.0
    %1311 = vmatprep.subr.mxu0 0.0
    %1312 = vmatpush1.msra.mxu0 0.0
    %1313 = vmatprep.subr.mxu0 0.0
    %1314 = vmatpush1.msra.mxu0 0.0
    %1315 = vmatprep.subr.mxu0 0.0
    %1316 = vmatpush1.msra.mxu0 0.0
    %1317 = vmatprep.subr.mxu0 0.0
    %1318 = vmatpush1.msra.mxu0 0.0
    %1319 = vmatprep.subr.mxu0 0.0
    %1320 = vmatpush1.msra.mxu0 0.0
    %1321 = vmatprep.subr.mxu0 0.0
    %1322 = vmatpush1.msra.mxu0 0.0
    %1323 = vmatprep.subr.mxu0 0.0
    %1324 = vmatpush1.msra.mxu0 0.0
    %1325 = vmatprep.subr.mxu0 0.0
    %1326 = vmatpush1.msra.mxu0 0.0
    %1327 = vmatprep.subr.mxu0 0.0
    %1328 = vmatpush1.msra.mxu0 0.0
    %1329 = vmatprep.subr.mxu0 0.0
    %1330 = vmatpush1.msra.mxu0 0.0
    %1331 = vmatprep.subr.mxu0 0.0
    %1332 = vmatpush1.msra.mxu0 0.0
    %1333 = vmatprep.subr.mxu0 0.0
    %1334 = vmatpush1.msra.mxu0 0.0
    %1335 = vmatprep.subr.mxu0 0.0
    %1336 = vmatpush1.msra.mxu0 0.0
    %1337 = vmatprep.subr.mxu0 0.0
    %1338 = vmatpush1.msra.mxu0 0.0
    %1339 = vmatprep.subr.mxu0 0.0
    %1340 = vmatpush1.msra.mxu0 0.0
    %1341 = vmatprep.subr.mxu0 0.0
    %1342 = vmatpush1.msra.mxu0 0.0
    %1343 = vmatprep.subr.mxu0 0.0
    %1344 = vmatpush1.msra.mxu0 0.0
    %1345 = vmatprep.subr.mxu0 0.0
    %1346 = vmatpush1.msra.mxu0 0.0
    %1347 = vmatprep.subr.mxu0 0.0
    %1348 = vmatpush1.msra.mxu0 0.0
    %1349 = vmatprep.subr.mxu0 0.0
    %1350 = vmatpush1.msra.mxu0 0.0
    %1351 = vmatprep.mubr.f32.mxu0 0.0
    %1352 = vmatmul.mubr.f32.gmra.mrb[0].mxu0 %v1285
    %v1353 = vpop.f32.mrb[0].mxu0
    %v1354 = vadd.f32 0.0, %v1353
    %v1355 = vpop.f32.mrb[0].mxu0
    %1356 = vdwg.mxu0
    %1357 = vrot.lane.b32.xlu0 %v171, 64
    %v1358 = vpop.permute.xlu0 %1357
    %v1361 = vsel %vm176, %v898, 0
    %1363 = vmatprep.subr.mxu0 0.0
    %1364 = vmatpush1.msra.mxu0 %v1358
    %1365 = vmatprep.subr.mxu0 0.0
    %1366 = vmatpush1.msra.mxu0 0.0
    %1367 = vmatprep.subr.mxu0 0.0
    %1368 = vmatpush1.msra.mxu0 0.0
    %1369 = vmatprep.subr.mxu0 0.0
    %1370 = vmatpush1.msra.mxu0 0.0
    %1371 = vmatprep.subr.mxu0 0.0
    %1372 = vmatpush1.msra.mxu0 0.0
    %1373 = vmatprep.subr.mxu0 0.0
    %1374 = vmatpush1.msra.mxu0 0.0
    %1375 = vmatprep.subr.mxu0 0.0
    %1376 = vmatpush1.msra.mxu0 0.0
    %1377 = vmatprep.subr.mxu0 0.0
    %1378 = vmatpush1.msra.mxu0 0.0
    %1379 = vmatprep.subr.mxu0 0.0
    %1380 = vmatpush1.msra.mxu0 0.0
    %1381 = vmatprep.subr.mxu0 0.0
    %1382 = vmatpush1.msra.mxu0 0.0
    %1383 = vmatprep.subr.mxu0 0.0
    %1384 = vmatpush1.msra.mxu0 0.0
    %1385 = vmatprep.subr.mxu0 0.0
    %1386 = vmatpush1.msra.mxu0 0.0
    %1387 = vmatprep.subr.mxu0 0.0
    %1388 = vmatpush1.msra.mxu0 0.0
    %1389 = vmatprep.subr.mxu0 0.0
    %1390 = vmatpush1.msra.mxu0 0.0
    %1391 = vmatprep.subr.mxu0 0.0
    %1392 = vmatpush1.msra.mxu0 0.0
    %1393 = vmatprep.subr.mxu0 0.0
    %1394 = vmatpush1.msra.mxu0 0.0
    %1395 = vmatprep.subr.mxu0 0.0
    %1396 = vmatpush1.msra.mxu0 0.0
    %1397 = vmatprep.subr.mxu0 0.0
    %1398 = vmatpush1.msra.mxu0 0.0
    %1399 = vmatprep.subr.mxu0 0.0
    %1400 = vmatpush1.msra.mxu0 0.0
    %1401 = vmatprep.subr.mxu0 0.0
    %1402 = vmatpush1.msra.mxu0 0.0
    %1403 = vmatprep.subr.mxu0 0.0
    %1404 = vmatpush1.msra.mxu0 0.0
    %1405 = vmatprep.subr.mxu0 0.0
    %1406 = vmatpush1.msra.mxu0 0.0
    %1407 = vmatprep.subr.mxu0 0.0
    %1408 = vmatpush1.msra.mxu0 0.0
    %1409 = vmatprep.subr.mxu0 0.0
    %1410 = vmatpush1.msra.mxu0 0.0
    %1411 = vmatprep.subr.mxu0 0.0
    %1412 = vmatpush1.msra.mxu0 0.0
    %1413 = vmatprep.subr.mxu0 0.0
    %1414 = vmatpush1.msra.mxu0 0.0
    %1415 = vmatprep.subr.mxu0 0.0
    %1416 = vmatpush1.msra.mxu0 0.0
    %1417 = vmatprep.subr.mxu0 0.0
    %1418 = vmatpush1.msra.mxu0 0.0
    %1419 = vmatprep.subr.mxu0 0.0
    %1420 = vmatpush1.msra.mxu0 0.0
    %1421 = vmatprep.subr.mxu0 0.0
    %1422 = vmatpush1.msra.mxu0 0.0
    %1423 = vmatprep.subr.mxu0 0.0
    %1424 = vmatpush1.msra.mxu0 0.0
    %1425 = vmatprep.subr.mxu0 0.0
    %1426 = vmatpush1.msra.mxu0 0.0
    %1427 = vmatprep.mubr.f32.mxu0 0.0
    %1428 = vmatmul.mubr.f32.gmra.mrb[0].mxu0 %v1361
    %v1429 = vpop.f32.mrb[0].mxu0
    %v1430 = vadd.f32 0.0, %v1429
    %v1431 = vpop.f32.mrb[0].mxu0
    %1432 = vdwg.mxu0
    %1433 = vrot.lane.b32.xlu0 %v173, 64
    %v1434 = vpop.permute.xlu0 %1433
    %v1437 = vsel %vm176, %v900, 0
    %1439 = vmatprep.subr.mxu0 0.0
    %1440 = vmatpush1.msra.mxu0 %v1434
    %1441 = vmatprep.subr.mxu0 0.0
    %1442 = vmatpush1.msra.mxu0 0.0
    %1443 = vmatprep.subr.mxu0 0.0
    %1444 = vmatpush1.msra.mxu0 0.0
    %1445 = vmatprep.subr.mxu0 0.0
    %1446 = vmatpush1.msra.mxu0 0.0
    %1447 = vmatprep.subr.mxu0 0.0
    %1448 = vmatpush1.msra.mxu0 0.0
    %1449 = vmatprep.subr.mxu0 0.0
    %1450 = vmatpush1.msra.mxu0 0.0
    %1451 = vmatprep.subr.mxu0 0.0
    %1452 = vmatpush1.msra.mxu0 0.0
    %1453 = vmatprep.subr.mxu0 0.0
    %1454 = vmatpush1.msra.mxu0 0.0
    %1455 = vmatprep.subr.mxu0 0.0
    %1456 = vmatpush1.msra.mxu0 0.0
    %1457 = vmatprep.subr.mxu0 0.0
    %1458 = vmatpush1.msra.mxu0 0.0
    %1459 = vmatprep.subr.mxu0 0.0
    %1460 = vmatpush1.msra.mxu0 0.0
    %1461 = vmatprep.subr.mxu0 0.0
    %1462 = vmatpush1.msra.mxu0 0.0
    %1463 = vmatprep.subr.mxu0 0.0
    %1464 = vmatpush1.msra.mxu0 0.0
    %1465 = vmatprep.subr.mxu0 0.0
    %1466 = vmatpush1.msra.mxu0 0.0
    %1467 = vmatprep.subr.mxu0 0.0
    %1468 = vmatpush1.msra.mxu0 0.0
    %1469 = vmatprep.subr.mxu0 0.0
    %1470 = vmatpush1.msra.mxu0 0.0
    %1471 = vmatprep.subr.mxu0 0.0
    %1472 = vmatpush1.msra.mxu0 0.0
    %1473 = vmatprep.subr.mxu0 0.0
    %1474 = vmatpush1.msra.mxu0 0.0
    %1475 = vmatprep.subr.mxu0 0.0
    %1476 = vmatpush1.msra.mxu0 0.0
    %1477 = vmatprep.subr.mxu0 0.0
    %1478 = vmatpush1.msra.mxu0 0.0
    %1479 = vmatprep.subr.mxu0 0.0
    %1480 = vmatpush1.msra.mxu0 0.0
    %1481 = vmatprep.subr.mxu0 0.0
    %1482 = vmatpush1.msra.mxu0 0.0
    %1483 = vmatprep.subr.mxu0 0.0
    %1484 = vmatpush1.msra.mxu0 0.0
    %1485 = vmatprep.subr.mxu0 0.0
    %1486 = vmatpush1.msra.mxu0 0.0
    %1487 = vmatprep.subr.mxu0 0.0
    %1488 = vmatpush1.msra.mxu0 0.0
    %1489 = vmatprep.subr.mxu0 0.0
    %1490 = vmatpush1.msra.mxu0 0.0
    %1491 = vmatprep.subr.mxu0 0.0
    %1492 = vmatpush1.msra.mxu0 0.0
    %1493 = vmatprep.subr.mxu0 0.0
    %1494 = vmatpush1.msra.mxu0 0.0
    %1495 = vmatprep.subr.mxu0 0.0
    %1496 = vmatpush1.msra.mxu0 0.0
    %1497 = vmatprep.subr.mxu0 0.0
    %1498 = vmatpush1.msra.mxu0 0.0
    %1499 = vmatprep.subr.mxu0 0.0
    %1500 = vmatpush1.msra.mxu0 0.0
    %1501 = vmatprep.subr.mxu0 0.0
    %1502 = vmatpush1.msra.mxu0 0.0
    %1503 = vmatprep.mubr.f32.mxu0 0.0
    %1504 = vmatmul.mubr.f32.gmra.mrb[0].mxu0 %v1437
    %v1505 = vpop.f32.mrb[0].mxu0
    %v1506 = vadd.f32 0.0, %v1505
    %v1507 = vpop.f32.mrb[0].mxu0
    %1508 = vdwg.mxu0
    %1511 = vrot.lane.b32.xlu0 %v1126, 8
    %v1512 = vpop.permute.xlu0 %1511
    %1513 = vrot.lane.b32.xlu0 %v1202, 8
    %v1514 = vpop.permute.xlu0 %1513
    %1519 = vrot.lane.b32.xlu0 %v1278, 16
    %v1520 = vpop.permute.xlu0 %1519
    %1521 = vrot.lane.b32.xlu0 %v1354, 16
    %v1522 = vpop.permute.xlu0 %1521
    %1527 = vrot.lane.b32.xlu0 %v1430, 24
    %v1528 = vpop.permute.xlu0 %1527
    %1529 = vrot.lane.b32.xlu0 %v1506, 24
    %v1530 = vpop.permute.xlu0 %1529
    %v1533 = vsel %vm176, %v974, %v1512
    %v1534 = vsel %vm176, %v1050, %v1514
    %vm1535 = vcmask 130048
    %v1536 = vsel %vm1535, %v1533, %v1520
    %v1537 = vsel %vm1535, %v1534, %v1522
    %vm1538 = vcmask 195584
    %v1539 = vsel %vm1538, %v1536, %v1528
    %v1540 = vsel %vm1538, %v1537, %v1530
    %v1541 = vld [vmem:[#allocation7] sm:$0xff]
    %v1542 = vld [vmem:[#allocation7 + $0x8] sm:$0xff]
    %v1543 = vld [vmem:[#allocation7 + $0x10] sm:$0xff]
    %v1544 = vld [vmem:[#allocation7 + $0x18] sm:$0xff]
    %v1545 = vld [vmem:[%s5] sm:$0x1]
    %v1547 = vlaneseq
    %v1548 = vshrl.u32 %v1547, 7
    %v1549 = vsub.s32 0, %v1548
    %v1550 = vrot.slane %v1545, %v1549
    %v1553 = vsel %vm78, %v1539, 0
    %v1556 = vsel %vm78, %v1540, 0
    %1558 = vmatprep.subr.mxu0 0.0
    %1559 = vmatpush1.msra.mxu0 %v1541
    %1560 = vmatprep.subr.mxu0 0.0
    %1561 = vmatpush1.msra.mxu0 %v1542
    %1562 = vmatprep.subr.mxu0 0.0
    %1563 = vmatpush1.msra.mxu0 %v1543
    %1564 = vmatprep.subr.mxu0 0.0
    %1565 = vmatpush1.msra.mxu0 %v1544
    %1566 = vmatprep.subr.mxu0 0.0
    %1567 = vmatpush1.msra.mxu0 0.0
    %1568 = vmatprep.subr.mxu0 0.0
    %1569 = vmatpush1.msra.mxu0 0.0
    %1570 = vmatprep.subr.mxu0 0.0
    %1571 = vmatpush1.msra.mxu0 0.0
    %1572 = vmatprep.subr.mxu0 0.0
    %1573 = vmatpush1.msra.mxu0 0.0
    %1574 = vmatprep.subr.mxu0 0.0
    %1575 = vmatpush1.msra.mxu0 0.0
    %1576 = vmatprep.subr.mxu0 0.0
    %1577 = vmatpush1.msra.mxu0 0.0
    %1578 = vmatprep.subr.mxu0 0.0
    %1579 = vmatpush1.msra.mxu0 0.0
    %1580 = vmatprep.subr.mxu0 0.0
    %1581 = vmatpush1.msra.mxu0 0.0
    %1582 = vmatprep.subr.mxu0 0.0
    %1583 = vmatpush1.msra.mxu0 0.0
    %1584 = vmatprep.subr.mxu0 0.0
    %1585 = vmatpush1.msra.mxu0 0.0
    %1586 = vmatprep.subr.mxu0 0.0
    %1587 = vmatpush1.msra.mxu0 0.0
    %1588 = vmatprep.subr.mxu0 0.0
    %1589 = vmatpush1.msra.mxu0 0.0
    %1590 = vmatprep.subr.mxu0 0.0
    %1591 = vmatpush1.msra.mxu0 0.0
    %1592 = vmatprep.subr.mxu0 0.0
    %1593 = vmatpush1.msra.mxu0 0.0
    %1594 = vmatprep.subr.mxu0 0.0
    %1595 = vmatpush1.msra.mxu0 0.0
    %1596 = vmatprep.subr.mxu0 0.0
    %1597 = vmatpush1.msra.mxu0 0.0
    %1598 = vmatprep.subr.mxu0 0.0
    %1599 = vmatpush1.msra.mxu0 0.0
    %1600 = vmatprep.subr.mxu0 0.0
    %1601 = vmatpush1.msra.mxu0 0.0
    %1602 = vmatprep.subr.mxu0 0.0
    %1603 = vmatpush1.msra.mxu0 0.0
    %1604 = vmatprep.subr.mxu0 0.0
    %1605 = vmatpush1.msra.mxu0 0.0
    %1606 = vmatprep.subr.mxu0 0.0
    %1607 = vmatpush1.msra.mxu0 0.0
    %1608 = vmatprep.subr.mxu0 0.0
    %1609 = vmatpush1.msra.mxu0 0.0
    %1610 = vmatprep.subr.mxu0 0.0
    %1611 = vmatpush1.msra.mxu0 0.0
    %1612 = vmatprep.subr.mxu0 0.0
    %1613 = vmatpush1.msra.mxu0 0.0
    %1614 = vmatprep.subr.mxu0 0.0
    %1615 = vmatpush1.msra.mxu0 0.0
    %1616 = vmatprep.subr.mxu0 0.0
    %1617 = vmatpush1.msra.mxu0 0.0
    %1618 = vmatprep.subr.mxu0 0.0
    %1619 = vmatpush1.msra.mxu0 0.0
    %1620 = vmatprep.subr.mxu0 0.0
    %1621 = vmatpush1.msra.mxu0 0.0
    %1622 = vmatprep.mubr.f32.mxu0 0.0
    %1623 = vmatmul.mubr.f32.gmra.mrb[0].mxu0 %v1553
    %v1624 = vpop.f32.mrb[0].mxu0
    %v1625 = vadd.f32 %v1550, %v1624
    %v1626 = vpop.f32.mrb[0].mxu0
    %1627 = vmatprep.mubr.f32.mxu0 0.0
    %1628 = vmatmul.mubr.f32.gmra.mrb[0].mxu0 %v1556
    %v1629 = vpop.f32.mrb[0].mxu0
    %v1630 = vadd.f32 %v1550, %v1629
    %v1631 = vpop.f32.mrb[0].mxu0
    %1632 = vdwg.mxu0
    %1633 = vst.msk [vmem:[#allocation8] sm:$0xff] %vm78, %v1625
    %1634 = vst.msk [vmem:[#allocation8 + $0x8] sm:$0xff] %vm78, %v1630
    // Predicated region
    $region38: #{tpu_custom_call.1} parent=1 // pred_check
      _
    $region39: #{tpu_custom_call.1} parent=1 // pred_check_branch
      %1636 = sbr.rel (0) target = $region41
    $region40: #{tpu_custom_call.1} parent=1 // pred_region
      %s1638 = ssub.s32 256, 256
      %1639 = vsyncadd [#allocation4], %s1638
      %s1640 = sshll.u32 [#allocation8], 4
      %s1641 = int_to_ptr.vmem [resolvable:$true] %s1640
      %1646 = dma.vmem_to_hbm [thread:$0]  %s1641, 256, %s6, [#allocation4], 128, 128, 8
    $region41: #{tpu_custom_call.1} parent=1 // pred_fallthru
      _
    // Predicated region
    $region42: #{tpu_custom_call.1} parent=1 // pred_check
      _
    $region43: #{tpu_custom_call.1} parent=1 // pred_check_branch
      %1648 = sbr.rel (0) target = $region45
    $region44: #{tpu_custom_call.1} parent=1 // pred_region
      %1649 = dma.done [#allocation4], 256
    $region45: #{tpu_custom_call.1} parent=1 // pred_fallthru
      _
    %1650 = vsyncpa [#allocation3], 1
    %1651 = vsyncpa [#allocation6], 1
    %1652 = vsyncpa [#allocation4], 1

</llo_original>
